<compile_context>
chip_gen: v5e
topology: v5e:2x2
jax: 0.10.0
libtpu: 0.0.40
codegen_flags: <defaults>
</compile_context>

<pallas_src>
import functools
import math

import jax
import jax.numpy as jnp
from jax.experimental import pallas as pl
from jax.experimental.pallas import tpu as pltpu


# ----------------------------- Pallas kernels ------------------------------

def _layernorm(x, g, b, eps):
    mean = jnp.mean(x, axis=-1, keepdims=True)
    var = jnp.mean((x - mean) ** 2, axis=-1, keepdims=True)
    return (x - mean) * jax.lax.rsqrt(var + eps) * g + b


def _embed_ln_kernel(x_ref, g_ref, b_ref, o_ref, *, eps):
    x = x_ref[0]                                    # (S, H)
    o_ref[0] = _layernorm(x, g_ref[...], b_ref[...], eps)


def embed_layernorm(x, gamma, beta, eps=1e-5):
    B, S, H = x.shape
    return pl.pallas_call(
        functools.partial(_embed_ln_kernel, eps=eps),
        out_shape=jax.ShapeDtypeStruct((B, S, H), jnp.float32),
        grid=(B,),
        in_specs=[
            pl.BlockSpec((1, S, H), lambda b: (b, 0, 0)),
            pl.BlockSpec((1, H), lambda b: (0, 0)),
            pl.BlockSpec((1, H), lambda b: (0, 0)),
        ],
        out_specs=pl.BlockSpec((1, S, H), lambda b: (b, 0, 0)),
        compiler_params=pltpu.CompilerParams(dimension_semantics=("parallel",)),
    )(x, gamma.reshape(1, H), beta.reshape(1, H))


def _encoder_layer_kernel(h_ref, mb_ref,
                          wqkv_ref, bqkv_ref, wo_ref, bo_ref,
                          ln1g_ref, ln1b_ref,
                          wi_ref, bi_ref, wout_ref, bout_ref,
                          ln2g_ref, ln2b_ref,
                          o_ref, *, num_heads, eps):
    x = h_ref[0]                                    # (S, H) residual input
    S, H = x.shape
    Dh = H // num_heads
    mask_bias = mb_ref[0]                           # (1, S) additive mask bias

    # --- self-attention: fused QKV matmul (softmax scale folded into wq/bq) ---
    qkv = jnp.dot(x, wqkv_ref[...],
                  preferred_element_type=jnp.float32) + bqkv_ref[...]   # (S, 3H)

    attn_out = None
    for hh in range(num_heads):
        qh = qkv[:, hh * Dh:(hh + 1) * Dh]                    # (S, Dh), pre-scaled
        kh = qkv[:, H + hh * Dh:H + (hh + 1) * Dh]            # (S, Dh)
        vh = qkv[:, 2 * H + hh * Dh:2 * H + (hh + 1) * Dh]    # (S, Dh)

        s = jnp.einsum("qd,kd->qk", qh, kh,
                       preferred_element_type=jnp.float32)    # (S, S)
        s = s + mask_bias
        s = s - jnp.max(s, axis=-1, keepdims=True)
        p = jnp.exp(s)
        p = p * pl.reciprocal(jnp.sum(p, axis=-1, keepdims=True), approx=False)
        ctx_h = jnp.dot(p, vh, preferred_element_type=jnp.float32)      # (S, Dh)

        # head-merge folded into output projection:
        #   concat_h(ctx_h) @ wo  ==  sum_h ctx_h @ wo[h*Dh:(h+1)*Dh, :]
        part = jnp.dot(ctx_h, wo_ref[hh * Dh:(hh + 1) * Dh, :],
                       preferred_element_type=jnp.float32)              # (S, H)
        attn_out = part if attn_out is None else attn_out + part
    attn_out = attn_out + bo_ref[...]

    h1 = _layernorm(attn_out + x, ln1g_ref[...], ln1b_ref[...], eps)

    # --- feed-forward ---
    ffn = jnp.dot(h1, wi_ref[...],
                  preferred_element_type=jnp.float32) + bi_ref[...]     # (S, I)
    # TODO(synk): HF RoBERTa uses exact (erf) GELU; tanh approximation used here.
    ffn = jax.nn.gelu(ffn, approximate=True)
    ffn = jnp.dot(ffn, wout_ref[...],
                  preferred_element_type=jnp.float32) + bout_ref[...]   # (S, H)

    o_ref[0] = _layernorm(ffn + h1, ln2g_ref[...], ln2b_ref[...], eps)


def encoder_layer(h, mask_bias, wqkv, bqkv, lp, num_heads, eps=1e-5):
    B, S, H = h.shape
    I = lp["wi"].shape[1]

    def full2(r, c):
        return pl.BlockSpec((r, c), lambda b: (0, 0))

    return pl.pallas_call(
        functools.partial(_encoder_layer_kernel, num_heads=num_heads, eps=eps),
        out_shape=jax.ShapeDtypeStruct((B, S, H), jnp.float32),
        grid=(B,),
        in_specs=[
            pl.BlockSpec((1, S, H), lambda b: (b, 0, 0)),   # hidden states
            pl.BlockSpec((1, 1, S), lambda b: (b, 0, 0)),   # additive mask bias
            full2(H, 3 * H), full2(1, 3 * H),               # wqkv, bqkv
            full2(H, H), full2(1, H),                       # wo, bo
            full2(1, H), full2(1, H),                       # ln1 gamma/beta
            full2(H, I), full2(1, I),                       # wi, bi
            full2(I, H), full2(1, H),                       # wout, bout
            full2(1, H), full2(1, H),                       # ln2 gamma/beta
        ],
        out_specs=pl.BlockSpec((1, S, H), lambda b: (b, 0, 0)),
        compiler_params=pltpu.CompilerParams(dimension_semantics=("parallel",)),
    )(h, mask_bias, wqkv, bqkv,
      lp["wo"], lp["bo"].reshape(1, H),
      lp["ln1_g"].reshape(1, H), lp["ln1_b"].reshape(1, H),
      lp["wi"], lp["bi"].reshape(1, I),
      lp["wout"], lp["bout"].reshape(1, H),
      lp["ln2_g"].reshape(1, H), lp["ln2_b"].reshape(1, H))


# ----------------------------- model (glue) --------------------------------

CFG = dict(vocab=100, hidden=32, layers=2, heads=4, inter=64,
           max_pos=64, num_labels=2, pad_id=1)


def init_params(key):
    c = CFG
    std = 0.02
    n_keys = 5 + c["layers"] * 6 + 2
    keys = list(jax.random.split(key, n_keys))
    nk = iter(keys)
    p = {}
    p["word_emb"] = jax.random.normal(next(nk), (c["vocab"], c["hidden"])) * std
    p["pos_emb"] = jax.random.normal(next(nk), (c["max_pos"], c["hidden"])) * std
    p["type_emb"] = jax.random.normal(next(nk), (1, c["hidden"])) * std
    p["emb_ln_g"] = jnp.ones((c["hidden"],))
    p["emb_ln_b"] = jnp.zeros((c["hidden"],))
    next(nk); next(nk)  # keep key budget deterministic
    p["layers"] = []
    for _ in range(c["layers"]):
        lk = {
            "wq": jax.random.normal(next(nk), (c["hidden"], c["hidden"])) * std,
            "wk": jax.random.normal(next(nk), (c["hidden"], c["hidden"])) * std,
            "wv": jax.random.normal(next(nk), (c["hidden"], c["hidden"])) * std,
            "wo": jax.random.normal(next(nk), (c["hidden"], c["hidden"])) * std,
            "wi": jax.random.normal(next(nk), (c["hidden"], c["inter"])) * std,
            "wout": jax.random.normal(next(nk), (c["inter"], c["hidden"])) * std,
            "bq": jnp.zeros((c["hidden"],)), "bk": jnp.zeros((c["hidden"],)),
            "bv": jnp.zeros((c["hidden"],)), "bo": jnp.zeros((c["hidden"],)),
            "bi": jnp.zeros((c["inter"],)), "bout": jnp.zeros((c["hidden"],)),
            "ln1_g": jnp.ones((c["hidden"],)), "ln1_b": jnp.zeros((c["hidden"],)),
            "ln2_g": jnp.ones((c["hidden"],)), "ln2_b": jnp.zeros((c["hidden"],)),
        }
        p["layers"].append(lk)
    p["cls_dense_w"] = jax.random.normal(next(nk), (c["hidden"], c["hidden"])) * std
    p["cls_dense_b"] = jnp.zeros((c["hidden"],))
    p["cls_out_w"] = jax.random.normal(next(nk), (c["hidden"], c["num_labels"])) * std
    p["cls_out_b"] = jnp.zeros((c["num_labels"],))
    return p


def roberta_forward(params, inputs, lens, mask, labels):
    del lens, labels  # lens unused by the reference forward; loss not returned
    c = CFG
    B, S = inputs.shape
    H, nH = c["hidden"], c["heads"]
    Dh = H // nH
    scale = 1.0 / math.sqrt(Dh)

    # --- embeddings (gathers in plain JAX, LayerNorm in Pallas) ---
    mask_f = mask.astype(jnp.float32)
    pos_ids = (jnp.cumsum(mask_f, axis=1) * mask_f).astype(jnp.int32) + c["pad_id"]
    tok = jnp.take(params["word_emb"], inputs, axis=0)
    pos = jnp.take(params["pos_emb"], pos_ids, axis=0)
    typ = params["type_emb"][0][None, None, :]
    h = (tok + pos + typ).astype(jnp.float32)                      # (B, S, H)
    h = embed_layernorm(h, params["emb_ln_g"], params["emb_ln_b"])

    # additive mask bias computed once, reused by every layer
    mask_bias = ((1.0 - mask_f) * (-1e9)).reshape(B, 1, S)

    # --- encoder layers: one fused pallas_call per layer ---
    for lp in params["layers"]:
        # fuse Q/K/V into one [H, 3H] weight; fold softmax scale into wq/bq
        wqkv = jnp.concatenate([lp["wq"] * scale, lp["wk"], lp["wv"]], axis=1)
        bqkv = jnp.concatenate([lp["bq"] * scale, lp["bk"], lp["bv"]]).reshape(1, 3 * H)
        h = encoder_layer(h, mask_bias, wqkv, bqkv, lp, nH)

    # --- classification head on <s> (first) token ---
    # Plain JAX per perf review: kernel dispatch would exceed the work by
    # orders of magnitude and a 2-wide lane output is a fully masked store.
    cls = h[:, 0, :]                                               # (B, H)
    cls = jnp.tanh(cls @ params["cls_dense_w"] + params["cls_dense_b"])
    logits = cls @ params["cls_out_w"] + params["cls_out_b"]
    return logits                                                  # (B, num_labels)


# --------------------------------- main -------------------------------------

if __name__ == "__main__":
    key = jax.random.PRNGKey(0)
    pkey, dkey = jax.random.split(key)
    params = init_params(pkey)

    B, S = 2, 8
    inputs = jax.random.randint(dkey, (B, S), 2, CFG["vocab"], dtype=jnp.int32)
    lens = jnp.array([8, 6], dtype=jnp.int32)
    mask = (jnp.arange(S)[None, :] < lens[:, None]).astype(jnp.float32)
    inputs = jnp.where(mask > 0, inputs, CFG["pad_id"]).astype(jnp.int32)
    labels = jnp.array([0, 1], dtype=jnp.int32)

    forward = jax.jit(roberta_forward)
    logits = forward(params, inputs, lens, mask, labels)
    logits = jax.block_until_ready(logits)
    assert logits.shape == (B, CFG["num_labels"])
    assert bool(jnp.all(jnp.isfinite(logits)))
    print("KERNEL_OK")
</pallas_src>

<mosaic_0001>
module attributes {stable_mosaic.version = 11 : i64} {
  func.func @_embed_ln_kernel(%arg0: i32, %arg1: memref<1x8x32xf32, #tpu.memory_space<vmem>>, %arg2: memref<1x32xf32, #tpu.memory_space<vmem>>, %arg3: memref<1x32xf32, #tpu.memory_space<vmem>>, %arg4: memref<1x8x32xf32, #tpu.memory_space<vmem>>) attributes {dimension_semantics = [#tpu.dimension_semantics<parallel>], iteration_bounds = array<i64: 2>, scalar_prefetch = 0 : i64, scratch_operands = 0 : i64, tpu.core_type = #tpu.core_type<tc>, window_params = [{transform_indices = @transform_0, window_bounds = array<i64: 1, 8, 32>}, {pipeline_mode = #tpu.pipeline_mode<synchronous>, transform_indices = @transform_1, window_bounds = array<i64: 1, 32>}, {pipeline_mode = #tpu.pipeline_mode<synchronous>, transform_indices = @transform_2, window_bounds = array<i64: 1, 32>}, {transform_indices = @transform_3, window_bounds = array<i64: 1, 8, 32>}]} {
    %c0 = arith.constant 0 : index
    %c0_0 = arith.constant 0 : index
    %c0_1 = arith.constant 0 : index
    %0 = vector.load %arg1[%c0, %c0_0, %c0_1] : memref<1x8x32xf32, #tpu.memory_space<vmem>>, vector<1x8x32xf32>
    %1 = vector.shape_cast %0 : vector<1x8x32xf32> to vector<8x32xf32>
    %c0_2 = arith.constant 0 : index
    %c0_3 = arith.constant 0 : index
    %2 = vector.load %arg2[%c0_2, %c0_3] : memref<1x32xf32, #tpu.memory_space<vmem>>, vector<1x32xf32>
    %c0_4 = arith.constant 0 : index
    %c0_5 = arith.constant 0 : index
    %3 = vector.load %arg3[%c0_4, %c0_5] : memref<1x32xf32, #tpu.memory_space<vmem>>, vector<1x32xf32>
    %cst = arith.constant dense<0.000000e+00> : vector<8xf32>
    %4 = vector.multi_reduction <add>, %1, %cst [1] : vector<8x32xf32> to vector<8xf32>
    %5 = vector.shape_cast %4 : vector<8xf32> to vector<8x1xf32>
    %cst_6 = arith.constant 3.200000e+01 : f32
    %6 = vector.broadcast %cst_6 : f32 to vector<8x1xf32>
    %7 = arith.divf %5, %6 : vector<8x1xf32>
    %8 = vector.broadcast %7 : vector<8x1xf32> to vector<8x32xf32>
    %9 = arith.subf %1, %8 : vector<8x32xf32>
    %10 = arith.mulf %9, %9 : vector<8x32xf32>
    %cst_7 = arith.constant dense<0.000000e+00> : vector<8xf32>
    %11 = vector.multi_reduction <add>, %10, %cst_7 [1] : vector<8x32xf32> to vector<8xf32>
    %12 = vector.shape_cast %11 : vector<8xf32> to vector<8x1xf32>
    %cst_8 = arith.constant 3.200000e+01 : f32
    %13 = vector.broadcast %cst_8 : f32 to vector<8x1xf32>
    %14 = arith.divf %12, %13 : vector<8x1xf32>
    %15 = vector.broadcast %7 : vector<8x1xf32> to vector<8x32xf32>
    %16 = arith.subf %1, %15 : vector<8x32xf32>
    %cst_9 = arith.constant 9.99999974E-6 : f32
    %17 = vector.broadcast %cst_9 : f32 to vector<8x1xf32>
    %18 = arith.addf %14, %17 : vector<8x1xf32>
    %19 = math.rsqrt %18 : vector<8x1xf32>
    %20 = vector.broadcast %19 : vector<8x1xf32> to vector<8x32xf32>
    %21 = arith.mulf %16, %20 : vector<8x32xf32>
    %22 = vector.broadcast %2 : vector<1x32xf32> to vector<8x32xf32>
    %23 = arith.mulf %21, %22 : vector<8x32xf32>
    %24 = vector.broadcast %3 : vector<1x32xf32> to vector<8x32xf32>
    %25 = arith.addf %23, %24 : vector<8x32xf32>
    %c0_10 = arith.constant 0 : index
    %c0_11 = arith.constant 0 : index
    %c0_12 = arith.constant 0 : index
    %26 = vector.load %arg4[%c0_10, %c0_11, %c0_12] : memref<1x8x32xf32, #tpu.memory_space<vmem>>, vector<1x8x32xf32>
    %27 = vector.shape_cast %26 : vector<1x8x32xf32> to vector<8x32xf32>
    %28 = vector.shape_cast %25 : vector<8x32xf32> to vector<1x8x32xf32>
    tpu.vector_store %arg4[%c0_10, %c0_11, %c0_12], %28 {strides = array<i32>} : memref<1x8x32xf32, #tpu.memory_space<vmem>>, vector<1x8x32xf32>,
    return
  }
  func.func @transform_0(%arg0: i32) -> (i32, i32, i32) {
    %c0_i32 = arith.constant 0 : i32
    %c0_i32_0 = arith.constant 0 : i32
    %c0_i32_1 = arith.constant 0 : i32
    return %arg0, %c0_i32, %c0_i32_0 : i32, i32, i32
  }
  func.func @transform_1(%arg0: i32) -> (i32, i32) {
    %c0_i32 = arith.constant 0 : i32
    %c0_i32_0 = arith.constant 0 : i32
    %c0_i32_1 = arith.constant 0 : i32
    return %c0_i32, %c0_i32_0 : i32, i32
  }
  func.func @transform_2(%arg0: i32) -> (i32, i32) {
    %c0_i32 = arith.constant 0 : i32
    %c0_i32_0 = arith.constant 0 : i32
    %c0_i32_1 = arith.constant 0 : i32
    return %c0_i32, %c0_i32_0 : i32, i32
  }
  func.func @transform_3(%arg0: i32) -> (i32, i32, i32) {
    %c0_i32 = arith.constant 0 : i32
    %c0_i32_0 = arith.constant 0 : i32
    %c0_i32_1 = arith.constant 0 : i32
    return %arg0, %c0_i32, %c0_i32_0 : i32, i32, i32
  }
}

module attributes {stable_mosaic.version = 11 : i64} {
  func.func @_encoder_layer_kernel(%arg0: i32, %arg1: memref<1x8x32xf32, #tpu.memory_space<vmem>>, %arg2: memref<1x1x8xf32, #tpu.memory_space<vmem>>, %arg3: memref<32x96xf32, #tpu.memory_space<vmem>>, %arg4: memref<1x96xf32, #tpu.memory_space<vmem>>, %arg5: memref<32x32xf32, #tpu.memory_space<vmem>>, %arg6: memref<1x32xf32, #tpu.memory_space<vmem>>, %arg7: memref<1x32xf32, #tpu.memory_space<vmem>>, %arg8: memref<1x32xf32, #tpu.memory_space<vmem>>, %arg9: memref<32x64xf32, #tpu.memory_space<vmem>>, %arg10: memref<1x64xf32, #tpu.memory_space<vmem>>, %arg11: memref<64x32xf32, #tpu.memory_space<vmem>>, %arg12: memref<1x32xf32, #tpu.memory_space<vmem>>, %arg13: memref<1x32xf32, #tpu.memory_space<vmem>>, %arg14: memref<1x32xf32, #tpu.memory_space<vmem>>, %arg15: memref<1x8x32xf32, #tpu.memory_space<vmem>>) attributes {dimension_semantics = [#tpu.dimension_semantics<parallel>], iteration_bounds = array<i64: 2>, scalar_prefetch = 0 : i64, scratch_operands = 0 : i64, tpu.core_type = #tpu.core_type<tc>, window_params = [{transform_indices = @transform_0, window_bounds = array<i64: 1, 8, 32>}, {transform_indices = @transform_1, window_bounds = array<i64: 1, 1, 8>}, {pipeline_mode = #tpu.pipeline_mode<synchronous>, transform_indices = @transform_2, window_bounds = array<i64: 32, 96>}, {pipeline_mode = #tpu.pipeline_mode<synchronous>, transform_indices = @transform_3, window_bounds = array<i64: 1, 96>}, {pipeline_mode = #tpu.pipeline_mode<synchronous>, transform_indices = @transform_4, window_bounds = array<i64: 32, 32>}, {pipeline_mode = #tpu.pipeline_mode<synchronous>, transform_indices = @transform_5, window_bounds = array<i64: 1, 32>}, {pipeline_mode = #tpu.pipeline_mode<synchronous>, transform_indices = @transform_6, window_bounds = array<i64: 1, 32>}, {pipeline_mode = #tpu.pipeline_mode<synchronous>, transform_indices = @transform_7, window_bounds = array<i64: 1, 32>}, {pipeline_mode = #tpu.pipeline_mode<synchronous>, transform_indices = @transform_8, window_bounds = array<i64: 32, 64>}, {pipeline_mode = #tpu.pipeline_mode<synchronous>, transform_indices = @transform_9, window_bounds = array<i64: 1, 64>}, {pipeline_mode = #tpu.pipeline_mode<synchronous>, transform_indices = @transform_10, window_bounds = array<i64: 64, 32>}, {pipeline_mode = #tpu.pipeline_mode<synchronous>, transform_indices = @transform_11, window_bounds = array<i64: 1, 32>}, {pipeline_mode = #tpu.pipeline_mode<synchronous>, transform_indices = @transform_12, window_bounds = array<i64: 1, 32>}, {pipeline_mode = #tpu.pipeline_mode<synchronous>, transform_indices = @transform_13, window_bounds = array<i64: 1, 32>}, {transform_indices = @transform_14, window_bounds = array<i64: 1, 8, 32>}]} {
    %c0 = arith.constant 0 : index
    %c0_0 = arith.constant 0 : index
    %c0_1 = arith.constant 0 : index
    %0 = vector.load %arg1[%c0, %c0_0, %c0_1] : memref<1x8x32xf32, #tpu.memory_space<vmem>>, vector<1x8x32xf32>
    %1 = vector.shape_cast %0 : vector<1x8x32xf32> to vector<8x32xf32>
    %c0_2 = arith.constant 0 : index
    %c0_3 = arith.constant 0 : index
    %c0_4 = arith.constant 0 : index
    %2 = vector.load %arg2[%c0_2, %c0_3, %c0_4] : memref<1x1x8xf32, #tpu.memory_space<vmem>>, vector<1x1x8xf32>
    %3 = vector.shape_cast %2 : vector<1x1x8xf32> to vector<1x8xf32>
    %c0_5 = arith.constant 0 : index
    %c0_6 = arith.constant 0 : index
    %4 = vector.load %arg3[%c0_5, %c0_6] : memref<32x96xf32, #tpu.memory_space<vmem>>, vector<32x96xf32>
    %cst = arith.constant dense<0.000000e+00> : vector<8x96xf32>
    %5 = tpu.matmul %1, %4, %cst {dimension_numbers = #tpu.dot_dimension_numbers<[1], [0], [0], [1], [0, 0, 1, 1], [], []>} : vector<8x32xf32>, vector<32x96xf32>, vector<8x96xf32> -> vector<8x96xf32>
    %c0_7 = arith.constant 0 : index
    %c0_8 = arith.constant 0 : index
    %6 = vector.load %arg4[%c0_7, %c0_8] : memref<1x96xf32, #tpu.memory_space<vmem>>, vector<1x96xf32>
    %7 = vector.broadcast %6 : vector<1x96xf32> to vector<8x96xf32>
    %8 = arith.addf %5, %7 : vector<8x96xf32>
    %9 = vector.extract_strided_slice %8 {offsets = [0, 0], sizes = [8, 8], strides = [1, 1]} : vector<8x96xf32> to vector<8x8xf32>
    %10 = vector.extract_strided_slice %8 {offsets = [0, 32], sizes = [8, 8], strides = [1, 1]} : vector<8x96xf32> to vector<8x8xf32>
    %11 = vector.extract_strided_slice %8 {offsets = [0, 64], sizes = [8, 8], strides = [1, 1]} : vector<8x96xf32> to vector<8x8xf32>
    "tpu.trace_start"() <{level = 10 : i32, message = "qd,kd->qk"}> : () -> ()
    %cst_9 = arith.constant dense<0.000000e+00> : vector<8x8xf32>
    %12 = tpu.matmul %9, %10, %cst_9 {dimension_numbers = #tpu.dot_dimension_numbers<[1], [1], [0], [0], [0, 0, 1, 0], [], []>} : vector<8x8xf32>, vector<8x8xf32>, vector<8x8xf32> -> vector<8x8xf32>
    "tpu.trace_stop"() : () -> ()
    %13 = vector.broadcast %3 : vector<1x8xf32> to vector<8x8xf32>
    %14 = arith.addf %12, %13 : vector<8x8xf32>
    %cst_10 = arith.constant dense<0xFF800000> : vector<8xf32>
    %15 = vector.multi_reduction <maximumf>, %14, %cst_10 [1] : vector<8x8xf32> to vector<8xf32>
    %16 = vector.shape_cast %15 : vector<8xf32> to vector<8x1xf32>
    %17 = vector.broadcast %16 : vector<8x1xf32> to vector<8x8xf32>
    %18 = arith.subf %14, %17 : vector<8x8xf32>
    %19 = math.exp %18 : vector<8x8xf32>
    %cst_11 = arith.constant dense<0.000000e+00> : vector<8xf32>
    %20 = vector.multi_reduction <add>, %19, %cst_11 [1] : vector<8x8xf32> to vector<8xf32>
    %21 = vector.shape_cast %20 : vector<8xf32> to vector<8x1xf32>
    %22 = tpu.reciprocal %21 : vector<8x1xf32> -> vector<8x1xf32>
    %23 = vector.broadcast %22 : vector<8x1xf32> to vector<8x8xf32>
    %24 = arith.mulf %19, %23 : vector<8x8xf32>
    %cst_12 = arith.constant dense<0.000000e+00> : vector<8x8xf32>
    %25 = tpu.matmul %24, %11, %cst_12 {dimension_numbers = #tpu.dot_dimension_numbers<[1], [0], [0], [1], [0, 0, 1, 1], [], []>} : vector<8x8xf32>, vector<8x8xf32>, vector<8x8xf32> -> vector<8x8xf32>
    %c0_13 = arith.constant 0 : index
    %c0_14 = arith.constant 0 : index
    %26 = vector.load %arg5[%c0_13, %c0_14] : memref<32x32xf32, #tpu.memory_space<vmem>>, vector<8x32xf32>
    %cst_15 = arith.constant dense<0.000000e+00> : vector<8x32xf32>
    %27 = tpu.matmul %25, %26, %cst_15 {dimension_numbers = #tpu.dot_dimension_numbers<[1], [0], [0], [1], [0, 0, 1, 1], [], []>} : vector<8x8xf32>, vector<8x32xf32>, vector<8x32xf32> -> vector<8x32xf32>
    %28 = vector.extract_strided_slice %8 {offsets = [0, 8], sizes = [8, 8], strides = [1, 1]} : vector<8x96xf32> to vector<8x8xf32>
    %29 = vector.extract_strided_slice %8 {offsets = [0, 40], sizes = [8, 8], strides = [1, 1]} : vector<8x96xf32> to vector<8x8xf32>
    %30 = vector.extract_strided_slice %8 {offsets = [0, 72], sizes = [8, 8], strides = [1, 1]} : vector<8x96xf32> to vector<8x8xf32>
    "tpu.trace_start"() <{level = 10 : i32, message = "qd,kd->qk"}> : () -> ()
    %cst_16 = arith.constant dense<0.000000e+00> : vector<8x8xf32>
    %31 = tpu.matmul %28, %29, %cst_16 {dimension_numbers = #tpu.dot_dimension_numbers<[1], [1], [0], [0], [0, 0, 1, 0], [], []>} : vector<8x8xf32>, vector<8x8xf32>, vector<8x8xf32> -> vector<8x8xf32>
    "tpu.trace_stop"() : () -> ()
    %32 = vector.broadcast %3 : vector<1x8xf32> to vector<8x8xf32>
    %33 = arith.addf %31, %32 : vector<8x8xf32>
    %cst_17 = arith.constant dense<0xFF800000> : vector<8xf32>
    %34 = vector.multi_reduction <maximumf>, %33, %cst_17 [1] : vector<8x8xf32> to vector<8xf32>
    %35 = vector.shape_cast %34 : vector<8xf32> to vector<8x1xf32>
    %36 = vector.broadcast %35 : vector<8x1xf32> to vector<8x8xf32>
    %37 = arith.subf %33, %36 : vector<8x8xf32>
    %38 = math.exp %37 : vector<8x8xf32>
    %cst_18 = arith.constant dense<0.000000e+00> : vector<8xf32>
    %39 = vector.multi_reduction <add>, %38, %cst_18 [1] : vector<8x8xf32> to vector<8xf32>
    %40 = vector.shape_cast %39 : vector<8xf32> to vector<8x1xf32>
    %41 = tpu.reciprocal %40 : vector<8x1xf32> -> vector<8x1xf32>
    %42 = vector.broadcast %41 : vector<8x1xf32> to vector<8x8xf32>
    %43 = arith.mulf %38, %42 : vector<8x8xf32>
    %cst_19 = arith.constant dense<0.000000e+00> : vector<8x8xf32>
    %44 = tpu.matmul %43, %30, %cst_19 {dimension_numbers = #tpu.dot_dimension_numbers<[1], [0], [0], [1], [0, 0, 1, 1], [], []>} : vector<8x8xf32>, vector<8x8xf32>, vector<8x8xf32> -> vector<8x8xf32>
    %c8 = arith.constant 8 : index
    %c0_20 = arith.constant 0 : index
    %45 = vector.load %arg5[%c8, %c0_20] : memref<32x32xf32, #tpu.memory_space<vmem>>, vector<8x32xf32>
    %cst_21 = arith.constant dense<0.000000e+00> : vector<8x32xf32>
    %46 = tpu.matmul %44, %45, %cst_21 {dimension_numbers = #tpu.dot_dimension_numbers<[1], [0], [0], [1], [0, 0, 1, 1], [], []>} : vector<8x8xf32>, vector<8x32xf32>, vector<8x32xf32> -> vector<8x32xf32>
    %47 = arith.addf %27, %46 : vector<8x32xf32>
    %48 = vector.extract_strided_slice %8 {offsets = [0, 16], sizes = [8, 8], strides = [1, 1]} : vector<8x96xf32> to vector<8x8xf32>
    %49 = vector.extract_strided_slice %8 {offsets = [0, 48], sizes = [8, 8], strides = [1, 1]} : vector<8x96xf32> to vector<8x8xf32>
    %50 = vector.extract_strided_slice %8 {offsets = [0, 80], sizes = [8, 8], strides = [1, 1]} : vector<8x96xf32> to vector<8x8xf32>
    "tpu.trace_start"() <{level = 10 : i32, message = "qd,kd->qk"}> : () -> ()
    %cst_22 = arith.constant dense<0.000000e+00> : vector<8x8xf32>
    %51 = tpu.matmul %48, %49, %cst_22 {dimension_numbers = #tpu.dot_dimension_numbers<[1], [1], [0], [0], [0, 0, 1, 0], [], []>} : vector<8x8xf32>, vector<8x8xf32>, vector<8x8xf32> -> vector<8x8xf32>
    "tpu.trace_stop"() : () -> ()
    %52 = vector.broadcast %3 : vector<1x8xf32> to vector<8x8xf32>
    %53 = arith.addf %51, %52 : vector<8x8xf32>
    %cst_23 = arith.constant dense<0xFF800000> : vector<8xf32>
    %54 = vector.multi_reduction <maximumf>, %53, %cst_23 [1] : vector<8x8xf32> to vector<8xf32>
    %55 = vector.shape_cast %54 : vector<8xf32> to vector<8x1xf32>
    %56 = vector.broadcast %55 : vector<8x1xf32> to vector<8x8xf32>
    %57 = arith.subf %53, %56 : vector<8x8xf32>
    %58 = math.exp %57 : vector<8x8xf32>
    %cst_24 = arith.constant dense<0.000000e+00> : vector<8xf32>
    %59 = vector.multi_reduction <add>, %58, %cst_24 [1] : vector<8x8xf32> to vector<8xf32>
    %60 = vector.shape_cast %59 : vector<8xf32> to vector<8x1xf32>
    %61 = tpu.reciprocal %60 : vector<8x1xf32> -> vector<8x1xf32>
    %62 = vector.broadcast %61 : vector<8x1xf32> to vector<8x8xf32>
    %63 = arith.mulf %58, %62 : vector<8x8xf32>
    %cst_25 = arith.constant dense<0.000000e+00> : vector<8x8xf32>
    %64 = tpu.matmul %63, %50, %cst_25 {dimension_numbers = #tpu.dot_dimension_numbers<[1], [0], [0], [1], [0, 0, 1, 1], [], []>} : vector<8x8xf32>, vector<8x8xf32>, vector<8x8xf32> -> vector<8x8xf32>
    %c16 = arith.constant 16 : index
    %c0_26 = arith.constant 0 : index
    %65 = vector.load %arg5[%c16, %c0_26] : memref<32x32xf32, #tpu.memory_space<vmem>>, vector<8x32xf32>
    %cst_27 = arith.constant dense<0.000000e+00> : vector<8x32xf32>
    %66 = tpu.matmul %64, %65, %cst_27 {dimension_numbers = #tpu.dot_dimension_numbers<[1], [0], [0], [1], [0, 0, 1, 1], [], []>} : vector<8x8xf32>, vector<8x32xf32>, vector<8x32xf32> -> vector<8x32xf32>
    %67 = arith.addf %47, %66 : vector<8x32xf32>
    %68 = vector.extract_strided_slice %8 {offsets = [0, 24], sizes = [8, 8], strides = [1, 1]} : vector<8x96xf32> to vector<8x8xf32>
    %69 = vector.extract_strided_slice %8 {offsets = [0, 56], sizes = [8, 8], strides = [1, 1]} : vector<8x96xf32> to vector<8x8xf32>
    %70 = vector.extract_strided_slice %8 {offsets = [0, 88], sizes = [8, 8], strides = [1, 1]} : vector<8x96xf32> to vector<8x8xf32>
    "tpu.trace_start"() <{level = 10 : i32, message = "qd,kd->qk"}> : () -> ()
    %cst_28 = arith.constant dense<0.000000e+00> : vector<8x8xf32>
    %71 = tpu.matmul %68, %69, %cst_28 {dimension_numbers = #tpu.dot_dimension_numbers<[1], [1], [0], [0], [0, 0, 1, 0], [], []>} : vector<8x8xf32>, vector<8x8xf32>, vector<8x8xf32> -> vector<8x8xf32>
    "tpu.trace_stop"() : () -> ()
    %72 = vector.broadcast %3 : vector<1x8xf32> to vector<8x8xf32>
    %73 = arith.addf %71, %72 : vector<8x8xf32>
    %cst_29 = arith.constant dense<0xFF800000> : vector<8xf32>
    %74 = vector.multi_reduction <maximumf>, %73, %cst_29 [1] : vector<8x8xf32> to vector<8xf32>
    %75 = vector.shape_cast %74 : vector<8xf32> to vector<8x1xf32>
    %76 = vector.broadcast %75 : vector<8x1xf32> to vector<8x8xf32>
    %77 = arith.subf %73, %76 : vector<8x8xf32>
    %78 = math.exp %77 : vector<8x8xf32>
    %cst_30 = arith.constant dense<0.000000e+00> : vector<8xf32>
    %79 = vector.multi_reduction <add>, %78, %cst_30 [1] : vector<8x8xf32> to vector<8xf32>
    %80 = vector.shape_cast %79 : vector<8xf32> to vector<8x1xf32>
    %81 = tpu.reciprocal %80 : vector<8x1xf32> -> vector<8x1xf32>
    %82 = vector.broadcast %81 : vector<8x1xf32> to vector<8x8xf32>
    %83 = arith.mulf %78, %82 : vector<8x8xf32>
    %cst_31 = arith.constant dense<0.000000e+00> : vector<8x8xf32>
    %84 = tpu.matmul %83, %70, %cst_31 {dimension_numbers = #tpu.dot_dimension_numbers<[1], [0], [0], [1], [0, 0, 1, 1], [], []>} : vector<8x8xf32>, vector<8x8xf32>, vector<8x8xf32> -> vector<8x8xf32>
    %c24 = arith.constant 24 : index
    %c0_32 = arith.constant 0 : index
    %85 = vector.load %arg5[%c24, %c0_32] : memref<32x32xf32, #tpu.memory_space<vmem>>, vector<8x32xf32>
    %cst_33 = arith.constant dense<0.000000e+00> : vector<8x32xf32>
    %86 = tpu.matmul %84, %85, %cst_33 {dimension_numbers = #tpu.dot_dimension_numbers<[1], [0], [0], [1], [0, 0, 1, 1], [], []>} : vector<8x8xf32>, vector<8x32xf32>, vector<8x32xf32> -> vector<8x32xf32>
    %87 = arith.addf %67, %86 : vector<8x32xf32>
    %c0_34 = arith.constant 0 : index
    %c0_35 = arith.constant 0 : index
    %88 = vector.load %arg6[%c0_34, %c0_35] : memref<1x32xf32, #tpu.memory_space<vmem>>, vector<1x32xf32>
    %89 = vector.broadcast %88 : vector<1x32xf32> to vector<8x32xf32>
    %90 = arith.addf %87, %89 : vector<8x32xf32>
    %91 = arith.addf %90, %1 : vector<8x32xf32>
    %c0_36 = arith.constant 0 : index
    %c0_37 = arith.constant 0 : index
    %92 = vector.load %arg7[%c0_36, %c0_37] : memref<1x32xf32, #tpu.memory_space<vmem>>, vector<1x32xf32>
    %c0_38 = arith.constant 0 : index
    %c0_39 = arith.constant 0 : index
    %93 = vector.load %arg8[%c0_38, %c0_39] : memref<1x32xf32, #tpu.memory_space<vmem>>, vector<1x32xf32>
    %cst_40 = arith.constant dense<0.000000e+00> : vector<8xf32>
    %94 = vector.multi_reduction <add>, %91, %cst_40 [1] : vector<8x32xf32> to vector<8xf32>
    %95 = vector.shape_cast %94 : vector<8xf32> to vector<8x1xf32>
    %cst_41 = arith.constant 3.200000e+01 : f32
    %96 = vector.broadcast %cst_41 : f32 to vector<8x1xf32>
    %97 = arith.divf %95, %96 : vector<8x1xf32>
    %98 = vector.broadcast %97 : vector<8x1xf32> to vector<8x32xf32>
    %99 = arith.subf %91, %98 : vector<8x32xf32>
    %100 = arith.mulf %99, %99 : vector<8x32xf32>
    %cst_42 = arith.constant dense<0.000000e+00> : vector<8xf32>
    %101 = vector.multi_reduction <add>, %100, %cst_42 [1] : vector<8x32xf32> to vector<8xf32>
    %102 = vector.shape_cast %101 : vector<8xf32> to vector<8x1xf32>
    %cst_43 = arith.constant 3.200000e+01 : f32
    %103 = vector.broadcast %cst_43 : f32 to vector<8x1xf32>
    %104 = arith.divf %102, %103 : vector<8x1xf32>
    %105 = vector.broadcast %97 : vector<8x1xf32> to vector<8x32xf32>
    %106 = arith.subf %91, %105 : vector<8x32xf32>
    %cst_44 = arith.constant 9.99999974E-6 : f32
    %107 = vector.broadcast %cst_44 : f32 to vector<8x1xf32>
    %108 = arith.addf %104, %107 : vector<8x1xf32>
    %109 = math.rsqrt %108 : vector<8x1xf32>
    %110 = vector.broadcast %109 : vector<8x1xf32> to vector<8x32xf32>
    %111 = arith.mulf %106, %110 : vector<8x32xf32>
    %112 = vector.broadcast %92 : vector<1x32xf32> to vector<8x32xf32>
    %113 = arith.mulf %111, %112 : vector<8x32xf32>
    %114 = vector.broadcast %93 : vector<1x32xf32> to vector<8x32xf32>
    %115 = arith.addf %113, %114 : vector<8x32xf32>
    %c0_45 = arith.constant 0 : index
    %c0_46 = arith.constant 0 : index
    %116 = vector.load %arg9[%c0_45, %c0_46] : memref<32x64xf32, #tpu.memory_space<vmem>>, vector<32x64xf32>
    %cst_47 = arith.constant dense<0.000000e+00> : vector<8x64xf32>
    %117 = tpu.matmul %115, %116, %cst_47 {dimension_numbers = #tpu.dot_dimension_numbers<[1], [0], [0], [1], [0, 0, 1, 1], [], []>} : vector<8x32xf32>, vector<32x64xf32>, vector<8x64xf32> -> vector<8x64xf32>
    %c0_48 = arith.constant 0 : index
    %c0_49 = arith.constant 0 : index
    %118 = vector.load %arg10[%c0_48, %c0_49] : memref<1x64xf32, #tpu.memory_space<vmem>>, vector<1x64xf32>
    %119 = vector.broadcast %118 : vector<1x64xf32> to vector<8x64xf32>
    %120 = arith.addf %117, %119 : vector<8x64xf32>
    %121 = arith.mulf %120, %120 : vector<8x64xf32>
    %122 = arith.mulf %120, %121 : vector<8x64xf32>
    %cst_50 = arith.constant 4.471500e-02 : f32
    %123 = vector.broadcast %cst_50 : f32 to vector<8x64xf32>
    %124 = arith.mulf %123, %122 : vector<8x64xf32>
    %125 = arith.addf %120, %124 : vector<8x64xf32>
    %cst_51 = arith.constant 0.797884583 : f32
    %126 = vector.broadcast %cst_51 : f32 to vector<8x64xf32>
    %127 = arith.mulf %126, %125 : vector<8x64xf32>
    %128 = math.tanh %127 : vector<8x64xf32>
    %cst_52 = arith.constant 1.000000e+00 : f32
    %129 = vector.broadcast %cst_52 : f32 to vector<8x64xf32>
    %130 = arith.addf %129, %128 : vector<8x64xf32>
    %cst_53 = arith.constant 5.000000e-01 : f32
    %131 = vector.broadcast %cst_53 : f32 to vector<8x64xf32>
    %132 = arith.mulf %131, %130 : vector<8x64xf32>
    %133 = arith.mulf %120, %132 : vector<8x64xf32>
    %c0_54 = arith.constant 0 : index
    %c0_55 = arith.constant 0 : index
    %134 = vector.load %arg11[%c0_54, %c0_55] : memref<64x32xf32, #tpu.memory_space<vmem>>, vector<64x32xf32>
    %cst_56 = arith.constant dense<0.000000e+00> : vector<8x32xf32>
    %135 = tpu.matmul %133, %134, %cst_56 {dimension_numbers = #tpu.dot_dimension_numbers<[1], [0], [0], [1], [0, 0, 1, 1], [], []>} : vector<8x64xf32>, vector<64x32xf32>, vector<8x32xf32> -> vector<8x32xf32>
    %c0_57 = arith.constant 0 : index
    %c0_58 = arith.constant 0 : index
    %136 = vector.load %arg12[%c0_57, %c0_58] : memref<1x32xf32, #tpu.memory_space<vmem>>, vector<1x32xf32>
    %137 = vector.broadcast %136 : vector<1x32xf32> to vector<8x32xf32>
    %138 = arith.addf %135, %137 : vector<8x32xf32>
    %139 = arith.addf %138, %115 : vector<8x32xf32>
    %c0_59 = arith.constant 0 : index
    %c0_60 = arith.constant 0 : index
    %140 = vector.load %arg13[%c0_59, %c0_60] : memref<1x32xf32, #tpu.memory_space<vmem>>, vector<1x32xf32>
    %c0_61 = arith.constant 0 : index
    %c0_62 = arith.constant 0 : index
    %141 = vector.load %arg14[%c0_61, %c0_62] : memref<1x32xf32, #tpu.memory_space<vmem>>, vector<1x32xf32>
    %cst_63 = arith.constant dense<0.000000e+00> : vector<8xf32>
    %142 = vector.multi_reduction <add>, %139, %cst_63 [1] : vector<8x32xf32> to vector<8xf32>
    %143 = vector.shape_cast %142 : vector<8xf32> to vector<8x1xf32>
    %cst_64 = arith.constant 3.200000e+01 : f32
    %144 = vector.broadcast %cst_64 : f32 to vector<8x1xf32>
    %145 = arith.divf %143, %144 : vector<8x1xf32>
    %146 = vector.broadcast %145 : vector<8x1xf32> to vector<8x32xf32>
    %147 = arith.subf %139, %146 : vector<8x32xf32>
    %148 = arith.mulf %147, %147 : vector<8x32xf32>
    %cst_65 = arith.constant dense<0.000000e+00> : vector<8xf32>
    %149 = vector.multi_reduction <add>, %148, %cst_65 [1] : vector<8x32xf32> to vector<8xf32>
    %150 = vector.shape_cast %149 : vector<8xf32> to vector<8x1xf32>
    %cst_66 = arith.constant 3.200000e+01 : f32
    %151 = vector.broadcast %cst_66 : f32 to vector<8x1xf32>
    %152 = arith.divf %150, %151 : vector<8x1xf32>
    %153 = vector.broadcast %145 : vector<8x1xf32> to vector<8x32xf32>
    %154 = arith.subf %139, %153 : vector<8x32xf32>
    %cst_67 = arith.constant 9.99999974E-6 : f32
    %155 = vector.broadcast %cst_67 : f32 to vector<8x1xf32>
    %156 = arith.addf %152, %155 : vector<8x1xf32>
    %157 = math.rsqrt %156 : vector<8x1xf32>
    %158 = vector.broadcast %157 : vector<8x1xf32> to vector<8x32xf32>
    %159 = arith.mulf %154, %158 : vector<8x32xf32>
    %160 = vector.broadcast %140 : vector<1x32xf32> to vector<8x32xf32>
    %161 = arith.mulf %159, %160 : vector<8x32xf32>
    %162 = vector.broadcast %141 : vector<1x32xf32> to vector<8x32xf32>
    %163 = arith.addf %161, %162 : vector<8x32xf32>
    %c0_68 = arith.constant 0 : index
    %c0_69 = arith.constant 0 : index
    %c0_70 = arith.constant 0 : index
    %164 = vector.load %arg15[%c0_68, %c0_69, %c0_70] : memref<1x8x32xf32, #tpu.memory_space<vmem>>, vector<1x8x32xf32>
    %165 = vector.shape_cast %164 : vector<1x8x32xf32> to vector<8x32xf32>
    %166 = vector.shape_cast %163 : vector<8x32xf32> to vector<1x8x32xf32>
    tpu.vector_store %arg15[%c0_68, %c0_69, %c0_70], %166 {strides = array<i32>} : memref<1x8x32xf32, #tpu.memory_space<vmem>>, vector<1x8x32xf32>,
    return
  }
  func.func @transform_0(%arg0: i32) -> (i32, i32, i32) {
    %c0_i32 = arith.constant 0 : i32
    %c0_i32_0 = arith.constant 0 : i32
    %c0_i32_1 = arith.constant 0 : i32
    return %arg0, %c0_i32, %c0_i32_0 : i32, i32, i32
  }
  func.func @transform_1(%arg0: i32) -> (i32, i32, i32) {
    %c0_i32 = arith.constant 0 : i32
    %c0_i32_0 = arith.constant 0 : i32
    %c0_i32_1 = arith.constant 0 : i32
    return %arg0, %c0_i32, %c0_i32_0 : i32, i32, i32
  }
  func.func @transform_2(%arg0: i32) -> (i32, i32) {
    %c0_i32 = arith.constant 0 : i32
    %c0_i32_0 = arith.constant 0 : i32
    %c0_i32_1 = arith.constant 0 : i32
    return %c0_i32, %c0_i32_0 : i32, i32
  }
  func.func @transform_3(%arg0: i32) -> (i32, i32) {
    %c0_i32 = arith.constant 0 : i32
    %c0_i32_0 = arith.constant 0 : i32
    %c0_i32_1 = arith.constant 0 : i32
    return %c0_i32, %c0_i32_0 : i32, i32
  }
  func.func @transform_4(%arg0: i32) -> (i32, i32) {
    %c0_i32 = arith.constant 0 : i32
    %c0_i32_0 = arith.constant 0 : i32
    %c0_i32_1 = arith.constant 0 : i32
    return %c0_i32, %c0_i32_0 : i32, i32
  }
  func.func @transform_5(%arg0: i32) -> (i32, i32) {
    %c0_i32 = arith.constant 0 : i32
    %c0_i32_0 = arith.constant 0 : i32
    %c0_i32_1 = arith.constant 0 : i32
    return %c0_i32, %c0_i32_0 : i32, i32
  }
  func.func @transform_6(%arg0: i32) -> (i32, i32) {
    %c0_i32 = arith.constant 0 : i32
    %c0_i32_0 = arith.constant 0 : i32
    %c0_i32_1 = arith.constant 0 : i32
    return %c0_i32, %c0_i32_0 : i32, i32
  }
  func.func @transform_7(%arg0: i32) -> (i32, i32) {
    %c0_i32 = arith.constant 0 : i32
    %c0_i32_0 = arith.constant 0 : i32
    %c0_i32_1 = arith.constant 0 : i32
    return %c0_i32, %c0_i32_0 : i32, i32
  }
  func.func @transform_8(%arg0: i32) -> (i32, i32) {
    %c0_i32 = arith.constant 0 : i32
    %c0_i32_0 = arith.constant 0 : i32
    %c0_i32_1 = arith.constant 0 : i32
    return %c0_i32, %c0_i32_0 : i32, i32
  }
  func.func @transform_9(%arg0: i32) -> (i32, i32) {
    %c0_i32 = arith.constant 0 : i32
    %c0_i32_0 = arith.constant 0 : i32
    %c0_i32_1 = arith.constant 0 : i32
    return %c0_i32, %c0_i32_0 : i32, i32
  }
  func.func @transform_10(%arg0: i32) -> (i32, i32) {
    %c0_i32 = arith.constant 0 : i32
    %c0_i32_0 = arith.constant 0 : i32
    %c0_i32_1 = arith.constant 0 : i32
    return %c0_i32, %c0_i32_0 : i32, i32
  }
  func.func @transform_11(%arg0: i32) -> (i32, i32) {
    %c0_i32 = arith.constant 0 : i32
    %c0_i32_0 = arith.constant 0 : i32
    %c0_i32_1 = arith.constant 0 : i32
    return %c0_i32, %c0_i32_0 : i32, i32
  }
  func.func @transform_12(%arg0: i32) -> (i32, i32) {
    %c0_i32 = arith.constant 0 : i32
    %c0_i32_0 = arith.constant 0 : i32
    %c0_i32_1 = arith.constant 0 : i32
    return %c0_i32, %c0_i32_0 : i32, i32
  }
  func.func @transform_13(%arg0: i32) -> (i32, i32) {
    %c0_i32 = arith.constant 0 : i32
    %c0_i32_0 = arith.constant 0 : i32
    %c0_i32_1 = arith.constant 0 : i32
    return %c0_i32, %c0_i32_0 : i32, i32
  }
  func.func @transform_14(%arg0: i32) -> (i32, i32, i32) {
    %c0_i32 = arith.constant 0 : i32
    %c0_i32_0 = arith.constant 0 : i32
    %c0_i32_1 = arith.constant 0 : i32
    return %arg0, %c0_i32, %c0_i32_0 : i32, i32, i32
  }
}

</mosaic_0001>

<llo_original>
// kernel: roberta_forward.3
$region0: #{roberta_forward.3}
  #allocation0 [shape = 'u32[]', space=smem, size = 0x4, offset = 0x4, fixed_abs, tag = 'smem constant byte address 0x4 - core index']
  #allocation1 [shape = 'u32[72,128]{1,0:T(1,128)}', space=vmem, size = 0x9000, scoped, tag = 'internal scratch']
  %s0 = inlined_call_operand.vmem [shape: f32[2,8,32], index: 0, kind: input, shape index: {}]
  %s1 = inlined_call_operand.vmem [shape: f32[1,32], index: 1, kind: input, shape index: {}]
  %s2 = inlined_call_operand.vmem [shape: f32[1,32], index: 2, kind: input, shape index: {}]
  %s3 = inlined_call_operand.vmem [shape: f32[2,8,32], index: 3, kind: output, shape index: {}]
  %s4 = sld [smem:[#allocation0]]
  $region45: #{roberta_forward.3} parent=0
    _
  %s6 = ssub.s32 1, %s4
  %s7 = scalar_select 0, %s6, %s4
  loop: start=0, step=1, limit=4
  $region2: #{roberta_forward.3} parent=0 // loop_pre_header
    _
  $region3: #{roberta_forward.3} parent=0 // loop_header
    %s9 = sphi 0, %s13
    %p10 = scmp.ge.s32.totalorder %s9, 4
    %s19 = sphi 0, %s21
    %s22 = sphi 0, %s19
    %s23 = sphi 0, %s22
    %s39 = sphi 0, %s23
    %s43 = sphi 0, %s43
    %s45 = sphi 0, %s43
    %s46 = sphi 0, %s45
    %s60 = sphi 0, %s46
    %s64 = sphi 0, %s64
    %s66 = sphi 0, %s64
    %s67 = sphi 0, %s66
    %s81 = sphi 0, %s67
    %s87 = sphi 0, %s89
    %s90 = sphi 0, %s87
    %s91 = sphi 0, %s90
    %s107 = sphi 0, %s91
  $region4: #{roberta_forward.3} parent=0 // loop_header_branch
    %12 = sbr.rel (%p10) target = $region8
  $region5: #{roberta_forward.3} parent=0 // loop_body
    %s14 = ssub.s32 %s9, 1
    %s15 = ssub.s32 %s9, 2
    %s16 = sadd.s32 %s9, 1
    %s17 = ssub.s32 %s9, %s16
    %p18 = scmp.eq.s32.totalorder %s17, 0
    %s20 = sadd.s32 %s19, 1
    %s21 = scalar_select %p18, %s19, %s20
    %p24 = pneg %p18
    %p25 = scmp.eq.s32.totalorder %s9, 1
    %p26 = por %p24, %p25
    %p27 = scmp.ne.s32.totalorder %s19, %s22
    %p28 = scmp.eq.s32.totalorder %s9, 0
    %p29 = por %p27, %p28
    %p30 = scmp.ne.s32.totalorder %s19, %s22
    %p31 = scmp.eq.s32.totalorder %s14, 1
    %p32 = por %p30, %p31
    %p33 = scmp.ne.s32.totalorder %s22, %s23
    %p34 = scmp.eq.s32.totalorder %s14, 0
    %p35 = por %p33, %p34
    %p36 = scmp.ne.s32.totalorder %s22, %s23
    %p37 = scmp.eq.s32.totalorder %s15, 1
    %p38 = por %p36, %p37
    %p40 = scmp.ne.s32.totalorder %s23, %s39
    %p41 = scmp.eq.s32.totalorder %s15, 0
    %p42 = por %p40, %p41
    %s44 = sadd.s32 %s43, 1
    %p47 = scmp.eq.s32.totalorder %s9, 1
    %p48 = scmp.ne.s32.totalorder %s43, %s45
    %p49 = scmp.eq.s32.totalorder %s9, 0
    %p50 = por %p48, %p49
    %p51 = scmp.ne.s32.totalorder %s43, %s45
    %p52 = scmp.eq.s32.totalorder %s14, 1
    %p53 = por %p51, %p52
    %p54 = scmp.ne.s32.totalorder %s45, %s46
    %p55 = scmp.eq.s32.totalorder %s14, 0
    %p56 = por %p54, %p55
    %p57 = scmp.ne.s32.totalorder %s45, %s46
    %p58 = scmp.eq.s32.totalorder %s15, 1
    %p59 = por %p57, %p58
    %p61 = scmp.ne.s32.totalorder %s46, %s60
    %p62 = scmp.eq.s32.totalorder %s15, 0
    %p63 = por %p61, %p62
    %s65 = sadd.s32 %s64, 1
    %p68 = scmp.eq.s32.totalorder %s9, 1
    %p69 = scmp.ne.s32.totalorder %s64, %s66
    %p70 = scmp.eq.s32.totalorder %s9, 0
    %p71 = por %p69, %p70
    %p72 = scmp.ne.s32.totalorder %s64, %s66
    %p73 = scmp.eq.s32.totalorder %s14, 1
    %p74 = por %p72, %p73
    %p75 = scmp.ne.s32.totalorder %s66, %s67
    %p76 = scmp.eq.s32.totalorder %s14, 0
    %p77 = por %p75, %p76
    %p78 = scmp.ne.s32.totalorder %s66, %s67
    %p79 = scmp.eq.s32.totalorder %s15, 1
    %p80 = por %p78, %p79
    %p82 = scmp.ne.s32.totalorder %s67, %s81
    %p83 = scmp.eq.s32.totalorder %s15, 0
    %p84 = por %p82, %p83
    %s85 = ssub.s32 %s9, %s16
    %p86 = scmp.eq.s32.totalorder %s85, 0
    %s88 = sadd.s32 %s87, 1
    %s89 = scalar_select %p86, %s87, %s88
    %p92 = pneg %p86
    %p93 = scmp.eq.s32.totalorder %s9, 1
    %p94 = por %p92, %p93
    %p95 = scmp.ne.s32.totalorder %s87, %s90
    %p96 = scmp.eq.s32.totalorder %s9, 0
    %p97 = por %p95, %p96
    %p98 = scmp.ne.s32.totalorder %s87, %s90
    %p99 = scmp.eq.s32.totalorder %s14, 1
    %p100 = por %p98, %p99
    %p101 = scmp.ne.s32.totalorder %s90, %s91
    %p102 = scmp.eq.s32.totalorder %s14, 0
    %p103 = por %p101, %p102
    %p104 = scmp.ne.s32.totalorder %s90, %s91
    %p105 = scmp.eq.s32.totalorder %s15, 1
    %p106 = por %p104, %p105
    %p108 = scmp.ne.s32.totalorder %s91, %s107
    %p109 = scmp.eq.s32.totalorder %s15, 0
    %p110 = por %p108, %p109
    %p111 = scmp.le.s32.totalorder 1, %s9
    %p112 = scmp.lt.s32.totalorder %s9, 3
    %p113 = pnand %p111, %p112
    %p114 = pneg %p113
    // Predicated region
    $region9: #{roberta_forward.3} parent=5 // pred_check
      _
    $region10: #{roberta_forward.3} parent=5 // pred_check_branch
      %116 = sbr.rel (%p113) target = $region12
    $region11: #{roberta_forward.3} parent=5 // pred_region
      %s117 = ssub.s32 %s9, 1
      // Predicated region
      $region13: #{roberta_forward.3} parent=11 // pred_check
        %p118 = pneg %p56
      $region14: #{roberta_forward.3} parent=11 // pred_check_branch
        %120 = sbr.rel (%p118) target = $region16
      $region15: #{roberta_forward.3} parent=11 // pred_region
        _
      $region16: #{roberta_forward.3} parent=11 // pred_fallthru
        _
      // Predicated region
      $region17: #{roberta_forward.3} parent=11 // pred_check
        %p121 = pneg %p77
      $region18: #{roberta_forward.3} parent=11 // pred_check_branch
        %123 = sbr.rel (%p121) target = $region20
      $region19: #{roberta_forward.3} parent=11 // pred_region
        _
      $region20: #{roberta_forward.3} parent=11 // pred_fallthru
        _
    $region12: #{roberta_forward.3} parent=5 // pred_fallthru
      _
    %p124 = scmp.lt.s32.totalorder %s9, 2
    // Predicated region
    $region21: #{roberta_forward.3} parent=5 // pred_check
      %p125 = pneg %p124
    $region22: #{roberta_forward.3} parent=5 // pred_check_branch
      %127 = sbr.rel (%p125) target = $region24
    $region23: #{roberta_forward.3} parent=5 // pred_region
      // Predicated region
      $region25: #{roberta_forward.3} parent=23 // pred_check
        %p128 = pneg %p29
      $region26: #{roberta_forward.3} parent=23 // pred_check_branch
        %130 = sbr.rel (%p128) target = $region28
      $region27: #{roberta_forward.3} parent=23 // pred_region
        %p131 = scmp.lt.s32.totalorder %s9, 1
        %s132 = scalar_select %p131, %s9, 1
        %s133 = smul.addr %s132, 8
        %s134 = scalar_lea.vmem %s0, %s133
      $region28: #{roberta_forward.3} parent=23 // pred_fallthru
        _
    $region24: #{roberta_forward.3} parent=5 // pred_fallthru
      _
    %p135 = scmp.le.s32.totalorder 1, %s9
    %p136 = scmp.lt.s32.totalorder %s9, 3
    %p137 = pnand %p135, %p136
    %p138 = pneg %p137
    // Predicated region
    $region29: #{roberta_forward.3} parent=5 // pred_check
      _
    $region30: #{roberta_forward.3} parent=5 // pred_check_branch
      %140 = sbr.rel (%p137) target = $region32
    $region31: #{roberta_forward.3} parent=5 // pred_region
      %s141 = ssub.s32 %s9, 1
      %p142 = scmp.lt.s32.totalorder %s14, 1
      %s143 = scalar_select %p142, %s14, 1
      %s144 = smul.addr %s143, 8
      %s145 = scalar_lea.vmem %s0, %s144
      %p146 = pneg %p35
      %p147 = pneg %p32
      %p148 = pneg %p56
      %p149 = pneg %p53
      %p150 = pneg %p77
      %p151 = pneg %p74
      %p152 = pneg %p103
      %p153 = pneg %p100
      %p154 = scmp.lt.s32.totalorder %s14, 1
      %s155 = scalar_select %p154, %s14, 1
      %s156 = smul.addr %s155, 8
      %s157 = scalar_lea.vmem %s3, %s156
      %p158 = scmp.lt.s32.totalorder %s14, 1
      %s159 = scalar_select %p158, %s14, 1
      %s160 = smul.addr %s159, 8
      %s161 = scalar_lea.vmem %s0, %s160
      %p162 = scmp.lt.s32.totalorder %s14, 1
      %s163 = scalar_select %p162, %s14, 1
      %s164 = smul.addr %s163, 8
      %s165 = scalar_lea.vmem %s3, %s164
      %v166 = vld [vmem:[%s161] sm:$0xff]
      %v167 = vld [vmem:[%s1] sm:$0x1]
      %v168 = vld [vmem:[%s2] sm:$0x1]
      %vm169 = vcmask 261120
      %v170 = vsel %vm169, %v166, 0.0
      %171 = vadd.xlane.f32.xlu0 %v170
      %v172 = vpop.xlane.xlu0 %171
      %v173 = vrcp.pop 32.0
      %v174 = vmul.f32 32.0, %v173
      %v175 = vsub.f32 1.0, %v174
      %v176 = vmul.f32 %v173, %v175
      %v177 = vadd.f32 %v173, %v176
      %vm178 = vweird.f32 %v173
      %v179 = vsel %vm178, %v173, %v177
      %v180 = vmul.f32 %v172, %v179
      %v181 = vsub.f32 %v166, %v180
      %v182 = vmul.f32 %v181, %v181
      %v183 = vsel %vm169, %v182, 0.0
      %184 = vadd.xlane.f32.xlu0 %v183
      %v185 = vpop.xlane.xlu0 %184
      %v186 = vmul.f32 %v185, %v179
      %v187 = vadd.f32 %v186, 1e-05
      %v188 = vrsqrt.pop %v187
      %v189 = vmul.f32 %v188, %v187
      %v190 = vmul.f32 %v189, %v188
      %v191 = vmul.f32 0.5, %v190
      %v192 = vsub.f32 1.5, %v191
      %v193 = vmul.f32 %v188, %v192
      %vm194 = vweird.f32 %v187
      %vm195 = vweird.f32 %v188
      %vm196 = vmor %vm194, %vm195
      %v197 = vsel %vm196, %v188, %v193
      %v198 = vmul.f32 %v181, %v197
      %v200 = vperm.slane %v167, 0
      %v202 = vmul.f32 %v198, %v200
      %v204 = vperm.slane %v168, 0
      %v206 = vadd.f32 %v202, %v204
      %207 = vst.msk [vmem:[%s165] sm:$0xff] %vm169, %v206
      %p208 = scmp.lt.s32.totalorder %s14, 1
      %s209 = scalar_select %p208, %s14, 1
      %s210 = smul.addr %s209, 8
      %s211 = scalar_lea.vmem %s3, %s210
      // Predicated region
      $region33: #{roberta_forward.3} parent=31 // pred_check
        %p212 = pneg %p100
      $region34: #{roberta_forward.3} parent=31 // pred_check_branch
        %214 = sbr.rel (%p212) target = $region36
      $region35: #{roberta_forward.3} parent=31 // pred_region
        _
      $region36: #{roberta_forward.3} parent=31 // pred_fallthru
        _
    $region32: #{roberta_forward.3} parent=5 // pred_fallthru
      _
    %p215 = scmp.le.s32.totalorder 2, %s9
    // Predicated region
    $region37: #{roberta_forward.3} parent=5 // pred_check
      %p216 = pneg %p215
    $region38: #{roberta_forward.3} parent=5 // pred_check_branch
      %218 = sbr.rel (%p216) target = $region40
    $region39: #{roberta_forward.3} parent=5 // pred_region
      %s219 = ssub.s32 %s9, 2
      // Predicated region
      $region41: #{roberta_forward.3} parent=39 // pred_check
        %p220 = pneg %p106
      $region42: #{roberta_forward.3} parent=39 // pred_check_branch
        %222 = sbr.rel (%p220) target = $region44
      $region43: #{roberta_forward.3} parent=39 // pred_region
        %p223 = scmp.lt.s32.totalorder %s15, 1
        %s224 = scalar_select %p223, %s15, 1
        %s225 = smul.addr %s224, 8
        %s226 = scalar_lea.vmem %s3, %s225
      $region44: #{roberta_forward.3} parent=39 // pred_fallthru
        _
    $region40: #{roberta_forward.3} parent=5 // pred_fallthru
      _
  $region6: #{roberta_forward.3} parent=0 // loop_footer
    %s13 = sadd.s32 1, %s9
  $region7: #{roberta_forward.3} parent=0 // loop_footer_branch
    %8 = sbr.rel target = $region3
  $region8: #{roberta_forward.3} parent=0 // loop_exit
    _

// kernel: roberta_forward.4
$region0: #{roberta_forward.4}
  #allocation0 [shape = 'u32[]', space=smem, size = 0x4, offset = 0x4, fixed_abs, tag = 'smem constant byte address 0x4 - core index']
  #allocation1 [shape = 'u32[72,128]{1,0:T(1,128)}', space=vmem, size = 0x9000, scoped, tag = 'internal scratch']
  %s0 = inlined_call_operand.vmem [shape: f32[2,8,32], index: 0, kind: input, shape index: {}]
  %s1 = inlined_call_operand.vmem [shape: f32[2,1,8], index: 1, kind: input, shape index: {}]
  %s2 = inlined_call_operand.vmem [shape: f32[32,96], index: 2, kind: input, shape index: {}]
  %s3 = inlined_call_operand.vmem [shape: f32[1,96], index: 3, kind: input, shape index: {}]
  %s4 = inlined_call_operand.vmem [shape: f32[32,32], index: 4, kind: input, shape index: {}]
  %s5 = inlined_call_operand.vmem [shape: f32[1,32], index: 5, kind: input, shape index: {}]
  %s6 = inlined_call_operand.vmem [shape: f32[1,32], index: 6, kind: input, shape index: {}]
  %s7 = inlined_call_operand.vmem [shape: f32[1,32], index: 7, kind: input, shape index: {}]
  %s8 = inlined_call_operand.vmem [shape: f32[32,64], index: 8, kind: input, shape index: {}]
  %s9 = inlined_call_operand.vmem [shape: f32[1,64], index: 9, kind: input, shape index: {}]
  %s10 = inlined_call_operand.vmem [shape: f32[64,32], index: 10, kind: input, shape index: {}]
  %s11 = inlined_call_operand.vmem [shape: f32[1,32], index: 11, kind: input, shape index: {}]
  %s12 = inlined_call_operand.vmem [shape: f32[1,32], index: 12, kind: input, shape index: {}]
  %s13 = inlined_call_operand.vmem [shape: f32[1,32], index: 13, kind: input, shape index: {}]
  %s14 = inlined_call_operand.vmem [shape: f32[2,8,32], index: 14, kind: output, shape index: {}]
  %s15 = sld [smem:[#allocation0]]
  $region89: #{roberta_forward.4} parent=0
    _
  %s17 = ssub.s32 1, %s15
  %s18 = scalar_select 0, %s17, %s15
  loop: start=0, step=1, limit=4
  $region2: #{roberta_forward.4} parent=0 // loop_pre_header
    _
  $region3: #{roberta_forward.4} parent=0 // loop_header
    %s20 = sphi 0, %s24
    %p21 = scmp.ge.s32.totalorder %s20, 4
    %s30 = sphi 0, %s32
    %s33 = sphi 0, %s30
    %s34 = sphi 0, %s33
    %s50 = sphi 0, %s34
    %s56 = sphi 0, %s58
    %s59 = sphi 0, %s56
    %s60 = sphi 0, %s59
    %s76 = sphi 0, %s60
    %s80 = sphi 0, %s80
    %s82 = sphi 0, %s80
    %s83 = sphi 0, %s82
    %s97 = sphi 0, %s83
    %s101 = sphi 0, %s101
    %s103 = sphi 0, %s101
    %s104 = sphi 0, %s103
    %s118 = sphi 0, %s104
    %s122 = sphi 0, %s122
    %s124 = sphi 0, %s122
    %s125 = sphi 0, %s124
    %s139 = sphi 0, %s125
    %s143 = sphi 0, %s143
    %s145 = sphi 0, %s143
    %s146 = sphi 0, %s145
    %s160 = sphi 0, %s146
    %s164 = sphi 0, %s164
    %s166 = sphi 0, %s164
    %s167 = sphi 0, %s166
    %s181 = sphi 0, %s167
    %s185 = sphi 0, %s185
    %s187 = sphi 0, %s185
    %s188 = sphi 0, %s187
    %s202 = sphi 0, %s188
    %s206 = sphi 0, %s206
    %s208 = sphi 0, %s206
    %s209 = sphi 0, %s208
    %s223 = sphi 0, %s209
    %s227 = sphi 0, %s227
    %s229 = sphi 0, %s227
    %s230 = sphi 0, %s229
    %s244 = sphi 0, %s230
    %s248 = sphi 0, %s248
    %s250 = sphi 0, %s248
    %s251 = sphi 0, %s250
    %s265 = sphi 0, %s251
    %s269 = sphi 0, %s269
    %s271 = sphi 0, %s269
    %s272 = sphi 0, %s271
    %s286 = sphi 0, %s272
    %s290 = sphi 0, %s290
    %s292 = sphi 0, %s290
    %s293 = sphi 0, %s292
    %s307 = sphi 0, %s293
    %s311 = sphi 0, %s311
    %s313 = sphi 0, %s311
    %s314 = sphi 0, %s313
    %s328 = sphi 0, %s314
    %s334 = sphi 0, %s336
    %s337 = sphi 0, %s334
    %s338 = sphi 0, %s337
    %s354 = sphi 0, %s338
  $region4: #{roberta_forward.4} parent=0 // loop_header_branch
    %23 = sbr.rel (%p21) target = $region8
  $region5: #{roberta_forward.4} parent=0 // loop_body
    %s25 = ssub.s32 %s20, 1
    %s26 = ssub.s32 %s20, 2
    %s27 = sadd.s32 %s20, 1
    %s28 = ssub.s32 %s20, %s27
    %p29 = scmp.eq.s32.totalorder %s28, 0
    %s31 = sadd.s32 %s30, 1
    %s32 = scalar_select %p29, %s30, %s31
    %p35 = pneg %p29
    %p36 = scmp.eq.s32.totalorder %s20, 1
    %p37 = por %p35, %p36
    %p38 = scmp.ne.s32.totalorder %s30, %s33
    %p39 = scmp.eq.s32.totalorder %s20, 0
    %p40 = por %p38, %p39
    %p41 = scmp.ne.s32.totalorder %s30, %s33
    %p42 = scmp.eq.s32.totalorder %s25, 1
    %p43 = por %p41, %p42
    %p44 = scmp.ne.s32.totalorder %s33, %s34
    %p45 = scmp.eq.s32.totalorder %s25, 0
    %p46 = por %p44, %p45
    %p47 = scmp.ne.s32.totalorder %s33, %s34
    %p48 = scmp.eq.s32.totalorder %s26, 1
    %p49 = por %p47, %p48
    %p51 = scmp.ne.s32.totalorder %s34, %s50
    %p52 = scmp.eq.s32.totalorder %s26, 0
    %p53 = por %p51, %p52
    %s54 = ssub.s32 %s20, %s27
    %p55 = scmp.eq.s32.totalorder %s54, 0
    %s57 = sadd.s32 %s56, 1
    %s58 = scalar_select %p55, %s56, %s57
    %p61 = pneg %p55
    %p62 = scmp.eq.s32.totalorder %s20, 1
    %p63 = por %p61, %p62
    %p64 = scmp.ne.s32.totalorder %s56, %s59
    %p65 = scmp.eq.s32.totalorder %s20, 0
    %p66 = por %p64, %p65
    %p67 = scmp.ne.s32.totalorder %s56, %s59
    %p68 = scmp.eq.s32.totalorder %s25, 1
    %p69 = por %p67, %p68
    %p70 = scmp.ne.s32.totalorder %s59, %s60
    %p71 = scmp.eq.s32.totalorder %s25, 0
    %p72 = por %p70, %p71
    %p73 = scmp.ne.s32.totalorder %s59, %s60
    %p74 = scmp.eq.s32.totalorder %s26, 1
    %p75 = por %p73, %p74
    %p77 = scmp.ne.s32.totalorder %s60, %s76
    %p78 = scmp.eq.s32.totalorder %s26, 0
    %p79 = por %p77, %p78
    %s81 = sadd.s32 %s80, 1
    %p84 = scmp.eq.s32.totalorder %s20, 1
    %p85 = scmp.ne.s32.totalorder %s80, %s82
    %p86 = scmp.eq.s32.totalorder %s20, 0
    %p87 = por %p85, %p86
    %p88 = scmp.ne.s32.totalorder %s80, %s82
    %p89 = scmp.eq.s32.totalorder %s25, 1
    %p90 = por %p88, %p89
    %p91 = scmp.ne.s32.totalorder %s82, %s83
    %p92 = scmp.eq.s32.totalorder %s25, 0
    %p93 = por %p91, %p92
    %p94 = scmp.ne.s32.totalorder %s82, %s83
    %p95 = scmp.eq.s32.totalorder %s26, 1
    %p96 = por %p94, %p95
    %p98 = scmp.ne.s32.totalorder %s83, %s97
    %p99 = scmp.eq.s32.totalorder %s26, 0
    %p100 = por %p98, %p99
    %s102 = sadd.s32 %s101, 1
    %p105 = scmp.eq.s32.totalorder %s20, 1
    %p106 = scmp.ne.s32.totalorder %s101, %s103
    %p107 = scmp.eq.s32.totalorder %s20, 0
    %p108 = por %p106, %p107
    %p109 = scmp.ne.s32.totalorder %s101, %s103
    %p110 = scmp.eq.s32.totalorder %s25, 1
    %p111 = por %p109, %p110
    %p112 = scmp.ne.s32.totalorder %s103, %s104
    %p113 = scmp.eq.s32.totalorder %s25, 0
    %p114 = por %p112, %p113
    %p115 = scmp.ne.s32.totalorder %s103, %s104
    %p116 = scmp.eq.s32.totalorder %s26, 1
    %p117 = por %p115, %p116
    %p119 = scmp.ne.s32.totalorder %s104, %s118
    %p120 = scmp.eq.s32.totalorder %s26, 0
    %p121 = por %p119, %p120
    %s123 = sadd.s32 %s122, 1
    %p126 = scmp.eq.s32.totalorder %s20, 1
    %p127 = scmp.ne.s32.totalorder %s122, %s124
    %p128 = scmp.eq.s32.totalorder %s20, 0
    %p129 = por %p127, %p128
    %p130 = scmp.ne.s32.totalorder %s122, %s124
    %p131 = scmp.eq.s32.totalorder %s25, 1
    %p132 = por %p130, %p131
    %p133 = scmp.ne.s32.totalorder %s124, %s125
    %p134 = scmp.eq.s32.totalorder %s25, 0
    %p135 = por %p133, %p134
    %p136 = scmp.ne.s32.totalorder %s124, %s125
    %p137 = scmp.eq.s32.totalorder %s26, 1
    %p138 = por %p136, %p137
    %p140 = scmp.ne.s32.totalorder %s125, %s139
    %p141 = scmp.eq.s32.totalorder %s26, 0
    %p142 = por %p140, %p141
    %s144 = sadd.s32 %s143, 1
    %p147 = scmp.eq.s32.totalorder %s20, 1
    %p148 = scmp.ne.s32.totalorder %s143, %s145
    %p149 = scmp.eq.s32.totalorder %s20, 0
    %p150 = por %p148, %p149
    %p151 = scmp.ne.s32.totalorder %s143, %s145
    %p152 = scmp.eq.s32.totalorder %s25, 1
    %p153 = por %p151, %p152
    %p154 = scmp.ne.s32.totalorder %s145, %s146
    %p155 = scmp.eq.s32.totalorder %s25, 0
    %p156 = por %p154, %p155
    %p157 = scmp.ne.s32.totalorder %s145, %s146
    %p158 = scmp.eq.s32.totalorder %s26, 1
    %p159 = por %p157, %p158
    %p161 = scmp.ne.s32.totalorder %s146, %s160
    %p162 = scmp.eq.s32.totalorder %s26, 0
    %p163 = por %p161, %p162
    %s165 = sadd.s32 %s164, 1
    %p168 = scmp.eq.s32.totalorder %s20, 1
    %p169 = scmp.ne.s32.totalorder %s164, %s166
    %p170 = scmp.eq.s32.totalorder %s20, 0
    %p171 = por %p169, %p170
    %p172 = scmp.ne.s32.totalorder %s164, %s166
    %p173 = scmp.eq.s32.totalorder %s25, 1
    %p174 = por %p172, %p173
    %p175 = scmp.ne.s32.totalorder %s166, %s167
    %p176 = scmp.eq.s32.totalorder %s25, 0
    %p177 = por %p175, %p176
    %p178 = scmp.ne.s32.totalorder %s166, %s167
    %p179 = scmp.eq.s32.totalorder %s26, 1
    %p180 = por %p178, %p179
    %p182 = scmp.ne.s32.totalorder %s167, %s181
    %p183 = scmp.eq.s32.totalorder %s26, 0
    %p184 = por %p182, %p183
    %s186 = sadd.s32 %s185, 1
    %p189 = scmp.eq.s32.totalorder %s20, 1
    %p190 = scmp.ne.s32.totalorder %s185, %s187
    %p191 = scmp.eq.s32.totalorder %s20, 0
    %p192 = por %p190, %p191
    %p193 = scmp.ne.s32.totalorder %s185, %s187
    %p194 = scmp.eq.s32.totalorder %s25, 1
    %p195 = por %p193, %p194
    %p196 = scmp.ne.s32.totalorder %s187, %s188
    %p197 = scmp.eq.s32.totalorder %s25, 0
    %p198 = por %p196, %p197
    %p199 = scmp.ne.s32.totalorder %s187, %s188
    %p200 = scmp.eq.s32.totalorder %s26, 1
    %p201 = por %p199, %p200
    %p203 = scmp.ne.s32.totalorder %s188, %s202
    %p204 = scmp.eq.s32.totalorder %s26, 0
    %p205 = por %p203, %p204
    %s207 = sadd.s32 %s206, 1
    %p210 = scmp.eq.s32.totalorder %s20, 1
    %p211 = scmp.ne.s32.totalorder %s206, %s208
    %p212 = scmp.eq.s32.totalorder %s20, 0
    %p213 = por %p211, %p212
    %p214 = scmp.ne.s32.totalorder %s206, %s208
    %p215 = scmp.eq.s32.totalorder %s25, 1
    %p216 = por %p214, %p215
    %p217 = scmp.ne.s32.totalorder %s208, %s209
    %p218 = scmp.eq.s32.totalorder %s25, 0
    %p219 = por %p217, %p218
    %p220 = scmp.ne.s32.totalorder %s208, %s209
    %p221 = scmp.eq.s32.totalorder %s26, 1
    %p222 = por %p220, %p221
    %p224 = scmp.ne.s32.totalorder %s209, %s223
    %p225 = scmp.eq.s32.totalorder %s26, 0
    %p226 = por %p224, %p225
    %s228 = sadd.s32 %s227, 1
    %p231 = scmp.eq.s32.totalorder %s20, 1
    %p232 = scmp.ne.s32.totalorder %s227, %s229
    %p233 = scmp.eq.s32.totalorder %s20, 0
    %p234 = por %p232, %p233
    %p235 = scmp.ne.s32.totalorder %s227, %s229
    %p236 = scmp.eq.s32.totalorder %s25, 1
    %p237 = por %p235, %p236
    %p238 = scmp.ne.s32.totalorder %s229, %s230
    %p239 = scmp.eq.s32.totalorder %s25, 0
    %p240 = por %p238, %p239
    %p241 = scmp.ne.s32.totalorder %s229, %s230
    %p242 = scmp.eq.s32.totalorder %s26, 1
    %p243 = por %p241, %p242
    %p245 = scmp.ne.s32.totalorder %s230, %s244
    %p246 = scmp.eq.s32.totalorder %s26, 0
    %p247 = por %p245, %p246
    %s249 = sadd.s32 %s248, 1
    %p252 = scmp.eq.s32.totalorder %s20, 1
    %p253 = scmp.ne.s32.totalorder %s248, %s250
    %p254 = scmp.eq.s32.totalorder %s20, 0
    %p255 = por %p253, %p254
    %p256 = scmp.ne.s32.totalorder %s248, %s250
    %p257 = scmp.eq.s32.totalorder %s25, 1
    %p258 = por %p256, %p257
    %p259 = scmp.ne.s32.totalorder %s250, %s251
    %p260 = scmp.eq.s32.totalorder %s25, 0
    %p261 = por %p259, %p260
    %p262 = scmp.ne.s32.totalorder %s250, %s251
    %p263 = scmp.eq.s32.totalorder %s26, 1
    %p264 = por %p262, %p263
    %p266 = scmp.ne.s32.totalorder %s251, %s265
    %p267 = scmp.eq.s32.totalorder %s26, 0
    %p268 = por %p266, %p267
    %s270 = sadd.s32 %s269, 1
    %p273 = scmp.eq.s32.totalorder %s20, 1
    %p274 = scmp.ne.s32.totalorder %s269, %s271
    %p275 = scmp.eq.s32.totalorder %s20, 0
    %p276 = por %p274, %p275
    %p277 = scmp.ne.s32.totalorder %s269, %s271
    %p278 = scmp.eq.s32.totalorder %s25, 1
    %p279 = por %p277, %p278
    %p280 = scmp.ne.s32.totalorder %s271, %s272
    %p281 = scmp.eq.s32.totalorder %s25, 0
    %p282 = por %p280, %p281
    %p283 = scmp.ne.s32.totalorder %s271, %s272
    %p284 = scmp.eq.s32.totalorder %s26, 1
    %p285 = por %p283, %p284
    %p287 = scmp.ne.s32.totalorder %s272, %s286
    %p288 = scmp.eq.s32.totalorder %s26, 0
    %p289 = por %p287, %p288
    %s291 = sadd.s32 %s290, 1
    %p294 = scmp.eq.s32.totalorder %s20, 1
    %p295 = scmp.ne.s32.totalorder %s290, %s292
    %p296 = scmp.eq.s32.totalorder %s20, 0
    %p297 = por %p295, %p296
    %p298 = scmp.ne.s32.totalorder %s290, %s292
    %p299 = scmp.eq.s32.totalorder %s25, 1
    %p300 = por %p298, %p299
    %p301 = scmp.ne.s32.totalorder %s292, %s293
    %p302 = scmp.eq.s32.totalorder %s25, 0
    %p303 = por %p301, %p302
    %p304 = scmp.ne.s32.totalorder %s292, %s293
    %p305 = scmp.eq.s32.totalorder %s26, 1
    %p306 = por %p304, %p305
    %p308 = scmp.ne.s32.totalorder %s293, %s307
    %p309 = scmp.eq.s32.totalorder %s26, 0
    %p310 = por %p308, %p309
    %s312 = sadd.s32 %s311, 1
    %p315 = scmp.eq.s32.totalorder %s20, 1
    %p316 = scmp.ne.s32.totalorder %s311, %s313
    %p317 = scmp.eq.s32.totalorder %s20, 0
    %p318 = por %p316, %p317
    %p319 = scmp.ne.s32.totalorder %s311, %s313
    %p320 = scmp.eq.s32.totalorder %s25, 1
    %p321 = por %p319, %p320
    %p322 = scmp.ne.s32.totalorder %s313, %s314
    %p323 = scmp.eq.s32.totalorder %s25, 0
    %p324 = por %p322, %p323
    %p325 = scmp.ne.s32.totalorder %s313, %s314
    %p326 = scmp.eq.s32.totalorder %s26, 1
    %p327 = por %p325, %p326
    %p329 = scmp.ne.s32.totalorder %s314, %s328
    %p330 = scmp.eq.s32.totalorder %s26, 0
    %p331 = por %p329, %p330
    %s332 = ssub.s32 %s20, %s27
    %p333 = scmp.eq.s32.totalorder %s332, 0
    %s335 = sadd.s32 %s334, 1
    %s336 = scalar_select %p333, %s334, %s335
    %p339 = pneg %p333
    %p340 = scmp.eq.s32.totalorder %s20, 1
    %p341 = por %p339, %p340
    %p342 = scmp.ne.s32.totalorder %s334, %s337
    %p343 = scmp.eq.s32.totalorder %s20, 0
    %p344 = por %p342, %p343
    %p345 = scmp.ne.s32.totalorder %s334, %s337
    %p346 = scmp.eq.s32.totalorder %s25, 1
    %p347 = por %p345, %p346
    %p348 = scmp.ne.s32.totalorder %s337, %s338
    %p349 = scmp.eq.s32.totalorder %s25, 0
    %p350 = por %p348, %p349
    %p351 = scmp.ne.s32.totalorder %s337, %s338
    %p352 = scmp.eq.s32.totalorder %s26, 1
    %p353 = por %p351, %p352
    %p355 = scmp.ne.s32.totalorder %s338, %s354
    %p356 = scmp.eq.s32.totalorder %s26, 0
    %p357 = por %p355, %p356
    %p358 = scmp.le.s32.totalorder 1, %s20
    %p359 = scmp.lt.s32.totalorder %s20, 3
    %p360 = pnand %p358, %p359
    %p361 = pneg %p360
    // Predicated region
    $region9: #{roberta_forward.4} parent=5 // pred_check
      _
    $region10: #{roberta_forward.4} parent=5 // pred_check_branch
      %363 = sbr.rel (%p360) target = $region12
    $region11: #{roberta_forward.4} parent=5 // pred_region
      %s364 = ssub.s32 %s20, 1
      // Predicated region
      $region13: #{roberta_forward.4} parent=11 // pred_check
        %p365 = pneg %p93
      $region14: #{roberta_forward.4} parent=11 // pred_check_branch
        %367 = sbr.rel (%p365) target = $region16
      $region15: #{roberta_forward.4} parent=11 // pred_region
        _
      $region16: #{roberta_forward.4} parent=11 // pred_fallthru
        _
      // Predicated region
      $region17: #{roberta_forward.4} parent=11 // pred_check
        %p368 = pneg %p114
      $region18: #{roberta_forward.4} parent=11 // pred_check_branch
        %370 = sbr.rel (%p368) target = $region20
      $region19: #{roberta_forward.4} parent=11 // pred_region
        _
      $region20: #{roberta_forward.4} parent=11 // pred_fallthru
        _
      // Predicated region
      $region21: #{roberta_forward.4} parent=11 // pred_check
        %p371 = pneg %p135
      $region22: #{roberta_forward.4} parent=11 // pred_check_branch
        %373 = sbr.rel (%p371) target = $region24
      $region23: #{roberta_forward.4} parent=11 // pred_region
        _
      $region24: #{roberta_forward.4} parent=11 // pred_fallthru
        _
      // Predicated region
      $region25: #{roberta_forward.4} parent=11 // pred_check
        %p374 = pneg %p156
      $region26: #{roberta_forward.4} parent=11 // pred_check_branch
        %376 = sbr.rel (%p374) target = $region28
      $region27: #{roberta_forward.4} parent=11 // pred_region
        _
      $region28: #{roberta_forward.4} parent=11 // pred_fallthru
        _
      // Predicated region
      $region29: #{roberta_forward.4} parent=11 // pred_check
        %p377 = pneg %p177
      $region30: #{roberta_forward.4} parent=11 // pred_check_branch
        %379 = sbr.rel (%p377) target = $region32
      $region31: #{roberta_forward.4} parent=11 // pred_region
        _
      $region32: #{roberta_forward.4} parent=11 // pred_fallthru
        _
      // Predicated region
      $region33: #{roberta_forward.4} parent=11 // pred_check
        %p380 = pneg %p198
      $region34: #{roberta_forward.4} parent=11 // pred_check_branch
        %382 = sbr.rel (%p380) target = $region36
      $region35: #{roberta_forward.4} parent=11 // pred_region
        _
      $region36: #{roberta_forward.4} parent=11 // pred_fallthru
        _
      // Predicated region
      $region37: #{roberta_forward.4} parent=11 // pred_check
        %p383 = pneg %p219
      $region38: #{roberta_forward.4} parent=11 // pred_check_branch
        %385 = sbr.rel (%p383) target = $region40
      $region39: #{roberta_forward.4} parent=11 // pred_region
        _
      $region40: #{roberta_forward.4} parent=11 // pred_fallthru
        _
      // Predicated region
      $region41: #{roberta_forward.4} parent=11 // pred_check
        %p386 = pneg %p240
      $region42: #{roberta_forward.4} parent=11 // pred_check_branch
        %388 = sbr.rel (%p386) target = $region44
      $region43: #{roberta_forward.4} parent=11 // pred_region
        _
      $region44: #{roberta_forward.4} parent=11 // pred_fallthru
        _
      // Predicated region
      $region45: #{roberta_forward.4} parent=11 // pred_check
        %p389 = pneg %p261
      $region46: #{roberta_forward.4} parent=11 // pred_check_branch
        %391 = sbr.rel (%p389) target = $region48
      $region47: #{roberta_forward.4} parent=11 // pred_region
        _
      $region48: #{roberta_forward.4} parent=11 // pred_fallthru
        _
      // Predicated region
      $region49: #{roberta_forward.4} parent=11 // pred_check
        %p392 = pneg %p282
      $region50: #{roberta_forward.4} parent=11 // pred_check_branch
        %394 = sbr.rel (%p392) target = $region52
      $region51: #{roberta_forward.4} parent=11 // pred_region
        _
      $region52: #{roberta_forward.4} parent=11 // pred_fallthru
        _
      // Predicated region
      $region53: #{roberta_forward.4} parent=11 // pred_check
        %p395 = pneg %p303
      $region54: #{roberta_forward.4} parent=11 // pred_check_branch
        %397 = sbr.rel (%p395) target = $region56
      $region55: #{roberta_forward.4} parent=11 // pred_region
        _
      $region56: #{roberta_forward.4} parent=11 // pred_fallthru
        _
      // Predicated region
      $region57: #{roberta_forward.4} parent=11 // pred_check
        %p398 = pneg %p324
      $region58: #{roberta_forward.4} parent=11 // pred_check_branch
        %400 = sbr.rel (%p398) target = $region60
      $region59: #{roberta_forward.4} parent=11 // pred_region
        _
      $region60: #{roberta_forward.4} parent=11 // pred_fallthru
        _
    $region12: #{roberta_forward.4} parent=5 // pred_fallthru
      _
    %p401 = scmp.lt.s32.totalorder %s20, 2
    // Predicated region
    $region61: #{roberta_forward.4} parent=5 // pred_check
      %p402 = pneg %p401
    $region62: #{roberta_forward.4} parent=5 // pred_check_branch
      %404 = sbr.rel (%p402) target = $region64
    $region63: #{roberta_forward.4} parent=5 // pred_region
      // Predicated region
      $region65: #{roberta_forward.4} parent=63 // pred_check
        %p405 = pneg %p40
      $region66: #{roberta_forward.4} parent=63 // pred_check_branch
        %407 = sbr.rel (%p405) target = $region68
      $region67: #{roberta_forward.4} parent=63 // pred_region
        %p408 = scmp.lt.s32.totalorder %s20, 1
        %s409 = scalar_select %p408, %s20, 1
        %s410 = smul.addr %s409, 8
        %s411 = scalar_lea.vmem %s0, %s410
      $region68: #{roberta_forward.4} parent=63 // pred_fallthru
        _
      // Predicated region
      $region69: #{roberta_forward.4} parent=63 // pred_check
        %p412 = pneg %p66
      $region70: #{roberta_forward.4} parent=63 // pred_check_branch
        %414 = sbr.rel (%p412) target = $region72
      $region71: #{roberta_forward.4} parent=63 // pred_region
        %p415 = scmp.lt.s32.totalorder %s20, 1
        %s416 = scalar_select %p415, %s20, 1
        %s417 = scalar_lea.vmem %s1, %s416
      $region72: #{roberta_forward.4} parent=63 // pred_fallthru
        _
    $region64: #{roberta_forward.4} parent=5 // pred_fallthru
      _
    %p418 = scmp.le.s32.totalorder 1, %s20
    %p419 = scmp.lt.s32.totalorder %s20, 3
    %p420 = pnand %p418, %p419
    %p421 = pneg %p420
    // Predicated region
    $region73: #{roberta_forward.4} parent=5 // pred_check
      _
    $region74: #{roberta_forward.4} parent=5 // pred_check_branch
      %423 = sbr.rel (%p420) target = $region76
    $region75: #{roberta_forward.4} parent=5 // pred_region
      %s424 = ssub.s32 %s20, 1
      %p425 = scmp.lt.s32.totalorder %s25, 1
      %s426 = scalar_select %p425, %s25, 1
      %s427 = smul.addr %s426, 8
      %s428 = scalar_lea.vmem %s0, %s427
      %p429 = pneg %p46
      %p430 = pneg %p43
      %p431 = scmp.lt.s32.totalorder %s25, 1
      %s432 = scalar_select %p431, %s25, 1
      %s433 = scalar_lea.vmem %s1, %s432
      %p434 = pneg %p72
      %p435 = pneg %p69
      %p436 = pneg %p93
      %p437 = pneg %p90
      %p438 = pneg %p114
      %p439 = pneg %p111
      %p440 = pneg %p135
      %p441 = pneg %p132
      %p442 = pneg %p156
      %p443 = pneg %p153
      %p444 = pneg %p177
      %p445 = pneg %p174
      %p446 = pneg %p198
      %p447 = pneg %p195
      %p448 = pneg %p219
      %p449 = pneg %p216
      %p450 = pneg %p240
      %p451 = pneg %p237
      %p452 = pneg %p261
      %p453 = pneg %p258
      %p454 = pneg %p282
      %p455 = pneg %p279
      %p456 = pneg %p303
      %p457 = pneg %p300
      %p458 = pneg %p324
      %p459 = pneg %p321
      %p460 = pneg %p350
      %p461 = pneg %p347
      %p462 = scmp.lt.s32.totalorder %s25, 1
      %s463 = scalar_select %p462, %s25, 1
      %s464 = smul.addr %s463, 8
      %s465 = scalar_lea.vmem %s14, %s464
      %p466 = scmp.lt.s32.totalorder %s25, 1
      %s467 = scalar_select %p466, %s25, 1
      %s468 = smul.addr %s467, 8
      %s469 = scalar_lea.vmem %s0, %s468
      %p470 = scmp.lt.s32.totalorder %s25, 1
      %s471 = scalar_select %p470, %s25, 1
      %s472 = scalar_lea.vmem %s1, %s471
      %p473 = scmp.lt.s32.totalorder %s25, 1
      %s474 = scalar_select %p473, %s25, 1
      %s475 = smul.addr %s474, 8
      %s476 = scalar_lea.vmem %s14, %s475
      %v477 = vld [vmem:[%s469] sm:$0xff]
      %v478 = vld [vmem:[%s472] sm:$0x1]
      %v479 = vld [vmem:[%s2] sm:$0xff]
      %v480 = vld [vmem:[%s2 + $0x8] sm:$0xff]
      %v481 = vld [vmem:[%s2 + $0x10] sm:$0xff]
      %v482 = vld [vmem:[%s2 + $0x18] sm:$0xff]
      %v483 = vld [vmem:[%s3] sm:$0x1]
      %v485 = vperm.slane %v483, 0
      %vm487 = vcmask 261120
      %v489 = vsel %vm487, %v477, 0
      %491 = vmatpush.msra.mxu0 0.0
      %492 = vmatpush.msra.mxu0 0.0
      %493 = vmatpush.msra.mxu0 0.0
      %494 = vmatpush.msra.mxu0 0.0
      %495 = vmatpush.msra.mxu0 0.0
      %496 = vmatpush.msra.mxu0 0.0
      %497 = vmatpush.msra.mxu0 0.0
      %498 = vmatpush.msra.mxu0 0.0
      %499 = vmatpush.msra.mxu0 0.0
      %500 = vmatpush.msra.mxu0 0.0
      %501 = vmatpush.msra.mxu0 0.0
      %502 = vmatpush.msra.mxu0 0.0
      %503 = vmatpush.msra.mxu0 %v482
      %504 = vmatpush.msra.mxu0 %v481
      %505 = vmatpush.msra.mxu0 %v480
      %506 = vmatpush.msra.mxu0 %v479
      %507 = vmatmul.f32.gmra.mxu0 %v489
      %v508 = vpop.f32.mrf.mxu0
      %v509 = vadd.f32 %v485, %v508
      %510 = vdwg.mxu0
      %v512 = vperm.slane %v478, 0
      %515 = vrot.lane.b32.xlu0 %v509, 96
      %v516 = vpop.permute.xlu0 %515
      %vm517 = vcmask 64512
      %v518 = vsel %vm517, %v509, 0
      %v520 = vsel %vm517, %v516, 0
      %522 = vmatpush.xpose.msra.mxu0 0.0
      %523 = vmatpush.xpose.msra.mxu0 0.0
      %524 = vmatpush.xpose.msra.mxu0 0.0
      %525 = vmatpush.xpose.msra.mxu0 0.0
      %526 = vmatpush.xpose.msra.mxu0 0.0
      %527 = vmatpush.xpose.msra.mxu0 0.0
      %528 = vmatpush.xpose.msra.mxu0 0.0
      %529 = vmatpush.xpose.msra.mxu0 0.0
      %530 = vmatpush.xpose.msra.mxu0 0.0
      %531 = vmatpush.xpose.msra.mxu0 0.0
      %532 = vmatpush.xpose.msra.mxu0 0.0
      %533 = vmatpush.xpose.msra.mxu0 0.0
      %534 = vmatpush.xpose.msra.mxu0 0.0
      %535 = vmatpush.xpose.msra.mxu0 0.0
      %536 = vmatpush.xpose.msra.mxu0 0.0
      %537 = vmatpush.xpose.msra.mxu0 %v520
      %538 = vmatmul.f32.gmra.mxu0 %v518
      %v539 = vpop.f32.mrf.mxu0
      %v540 = vadd.f32 %v512, %v539
      %541 = vdwg.mxu0
      %v542 = vsel %vm517, %v540, -inf
      %543 = vmax.xlane.f32.xlu0 %v542
      %v544 = vpop.xlane.xlu0 %543
      %v545 = vsub.f32 %v540, %v544
      %v546 = vmul.f32 %v545, 1.442695
      %v547 = vpow.pop %v546
      %v548 = vsel %vm517, %v547, 0.0
      %549 = vadd.xlane.f32.xlu0 %v548
      %v550 = vpop.xlane.xlu0 %549
      %v551 = vrcp.pop %v550
      %v552 = vmul.f32 %v550, %v551
      %v553 = vsub.f32 1.0, %v552
      %v554 = vmul.f32 %v551, %v553
      %v555 = vadd.f32 %v551, %v554
      %vm556 = vweird.f32 %v550
      %vm557 = vweird.f32 %v551
      %vm558 = vmor %vm556, %vm557
      %v559 = vsel %vm558, %v551, %v555
      %v560 = vand.u32 2147483647, %v550
      %vm561 = vcmp.eq.f32.partialorder %v560, 8.507059e+37
      %v562 = vand.u32 %v550, 2147483648
      %v563 = vor.u32 1.1754944e-38, %v562
      %v564 = vsel %vm561, %v563, %v559
      %v565 = vmul.f32 %v547, %v564
      %566 = vrot.lane.b32.xlu0 %v509, 64
      %v567 = vpop.permute.xlu0 %566
      %v570 = vsel %vm517, %v565, 0
      %572 = vmatpush.msra.mxu0 0.0
      %573 = vmatpush.msra.mxu0 0.0
      %574 = vmatpush.msra.mxu0 0.0
      %575 = vmatpush.msra.mxu0 0.0
      %576 = vmatpush.msra.mxu0 0.0
      %577 = vmatpush.msra.mxu0 0.0
      %578 = vmatpush.msra.mxu0 0.0
      %579 = vmatpush.msra.mxu0 0.0
      %580 = vmatpush.msra.mxu0 0.0
      %581 = vmatpush.msra.mxu0 0.0
      %582 = vmatpush.msra.mxu0 0.0
      %583 = vmatpush.msra.mxu0 0.0
      %584 = vmatpush.msra.mxu0 0.0
      %585 = vmatpush.msra.mxu0 0.0
      %586 = vmatpush.msra.mxu0 0.0
      %587 = vmatpush.msra.mxu0 %v567
      %588 = vmatmul.f32.gmra.mxu0 %v570
      %v589 = vpop.f32.mrf.mxu0
      %v590 = vadd.f32 0.0, %v589
      %591 = vdwg.mxu0
      %v592 = vld [vmem:[%s4] sm:$0xff]
      %593 = vrot.lane.b32.xlu0 %v509, 120
      %v594 = vpop.permute.xlu0 %593
      %595 = vrot.lane.b32.xlu0 %v509, 88
      %v596 = vpop.permute.xlu0 %595
      %v597 = vsel %vm517, %v594, 0
      %v599 = vsel %vm517, %v596, 0
      %601 = vmatpush.xpose.msra.mxu0 0.0
      %602 = vmatpush.xpose.msra.mxu0 0.0
      %603 = vmatpush.xpose.msra.mxu0 0.0
      %604 = vmatpush.xpose.msra.mxu0 0.0
      %605 = vmatpush.xpose.msra.mxu0 0.0
      %606 = vmatpush.xpose.msra.mxu0 0.0
      %607 = vmatpush.xpose.msra.mxu0 0.0
      %608 = vmatpush.xpose.msra.mxu0 0.0
      %609 = vmatpush.xpose.msra.mxu0 0.0
      %610 = vmatpush.xpose.msra.mxu0 0.0
      %611 = vmatpush.xpose.msra.mxu0 0.0
      %612 = vmatpush.xpose.msra.mxu0 0.0
      %613 = vmatpush.xpose.msra.mxu0 0.0
      %614 = vmatpush.xpose.msra.mxu0 0.0
      %615 = vmatpush.xpose.msra.mxu0 0.0
      %616 = vmatpush.xpose.msra.mxu0 %v599
      %617 = vmatmul.f32.gmra.mxu0 %v597
      %v618 = vpop.f32.mrf.mxu0
      %v619 = vadd.f32 %v512, %v618
      %620 = vdwg.mxu0
      %v621 = vsel %vm517, %v619, -inf
      %622 = vmax.xlane.f32.xlu0 %v621
      %v623 = vpop.xlane.xlu0 %622
      %v624 = vsub.f32 %v619, %v623
      %v625 = vmul.f32 %v624, 1.442695
      %v626 = vpow.pop %v625
      %v627 = vsel %vm517, %v626, 0.0
      %628 = vadd.xlane.f32.xlu0 %v627
      %v629 = vpop.xlane.xlu0 %628
      %v630 = vrcp.pop %v629
      %v631 = vmul.f32 %v629, %v630
      %v632 = vsub.f32 1.0, %v631
      %v633 = vmul.f32 %v630, %v632
      %v634 = vadd.f32 %v630, %v633
      %vm635 = vweird.f32 %v629
      %vm636 = vweird.f32 %v630
      %vm637 = vmor %vm635, %vm636
      %v638 = vsel %vm637, %v630, %v634
      %v639 = vand.u32 2147483647, %v629
      %vm640 = vcmp.eq.f32.partialorder %v639, 8.507059e+37
      %v641 = vand.u32 %v629, 2147483648
      %v642 = vor.u32 1.1754944e-38, %v641
      %v643 = vsel %vm640, %v642, %v638
      %v644 = vmul.f32 %v626, %v643
      %645 = vrot.lane.b32.xlu0 %v509, 56
      %v646 = vpop.permute.xlu0 %645
      %v649 = vsel %vm517, %v644, 0
      %651 = vmatpush.msra.mxu0 0.0
      %652 = vmatpush.msra.mxu0 0.0
      %653 = vmatpush.msra.mxu0 0.0
      %654 = vmatpush.msra.mxu0 0.0
      %655 = vmatpush.msra.mxu0 0.0
      %656 = vmatpush.msra.mxu0 0.0
      %657 = vmatpush.msra.mxu0 0.0
      %658 = vmatpush.msra.mxu0 0.0
      %659 = vmatpush.msra.mxu0 0.0
      %660 = vmatpush.msra.mxu0 0.0
      %661 = vmatpush.msra.mxu0 0.0
      %662 = vmatpush.msra.mxu0 0.0
      %663 = vmatpush.msra.mxu0 0.0
      %664 = vmatpush.msra.mxu0 0.0
      %665 = vmatpush.msra.mxu0 0.0
      %666 = vmatpush.msra.mxu0 %v646
      %667 = vmatmul.f32.gmra.mxu0 %v649
      %v668 = vpop.f32.mrf.mxu0
      %v669 = vadd.f32 0.0, %v668
      %670 = vdwg.mxu0
      %v671 = vld [vmem:[%s4 + $0x8] sm:$0xff]
      %v673 = vsel %vm517, %v669, 0
      %675 = vmatpush.msra.mxu0 0.0
      %676 = vmatpush.msra.mxu0 0.0
      %677 = vmatpush.msra.mxu0 0.0
      %678 = vmatpush.msra.mxu0 0.0
      %679 = vmatpush.msra.mxu0 0.0
      %680 = vmatpush.msra.mxu0 0.0
      %681 = vmatpush.msra.mxu0 0.0
      %682 = vmatpush.msra.mxu0 0.0
      %683 = vmatpush.msra.mxu0 0.0
      %684 = vmatpush.msra.mxu0 0.0
      %685 = vmatpush.msra.mxu0 0.0
      %686 = vmatpush.msra.mxu0 0.0
      %687 = vmatpush.msra.mxu0 0.0
      %688 = vmatpush.msra.mxu0 0.0
      %689 = vmatpush.msra.mxu0 0.0
      %690 = vmatpush.msra.mxu0 %v671
      %691 = vmatmul.f32.gmra.mxu0 %v673
      %v692 = vpop.f32.mrf.mxu0
      %v693 = vadd.f32 0.0, %v692
      %694 = vdwg.mxu0
      %v696 = vsel %vm517, %v590, 0
      %698 = vmatpush.msra.mxu0 0.0
      %699 = vmatpush.msra.mxu0 0.0
      %700 = vmatpush.msra.mxu0 0.0
      %701 = vmatpush.msra.mxu0 0.0
      %702 = vmatpush.msra.mxu0 0.0
      %703 = vmatpush.msra.mxu0 0.0
      %704 = vmatpush.msra.mxu0 0.0
      %705 = vmatpush.msra.mxu0 0.0
      %706 = vmatpush.msra.mxu0 0.0
      %707 = vmatpush.msra.mxu0 0.0
      %708 = vmatpush.msra.mxu0 0.0
      %709 = vmatpush.msra.mxu0 0.0
      %710 = vmatpush.msra.mxu0 0.0
      %711 = vmatpush.msra.mxu0 0.0
      %712 = vmatpush.msra.mxu0 0.0
      %713 = vmatpush.msra.mxu0 %v592
      %714 = vmatmul.f32.gmra.mxu0 %v696
      %v715 = vpop.f32.mrf.mxu0
      %v716 = vadd.f32 %v693, %v715
      %717 = vdwg.mxu0
      %718 = vrot.lane.b32.xlu0 %v509, 112
      %v719 = vpop.permute.xlu0 %718
      %720 = vrot.lane.b32.xlu0 %v509, 80
      %v721 = vpop.permute.xlu0 %720
      %v722 = vsel %vm517, %v719, 0
      %v724 = vsel %vm517, %v721, 0
      %726 = vmatpush.xpose.msra.mxu0 0.0
      %727 = vmatpush.xpose.msra.mxu0 0.0
      %728 = vmatpush.xpose.msra.mxu0 0.0
      %729 = vmatpush.xpose.msra.mxu0 0.0
      %730 = vmatpush.xpose.msra.mxu0 0.0
      %731 = vmatpush.xpose.msra.mxu0 0.0
      %732 = vmatpush.xpose.msra.mxu0 0.0
      %733 = vmatpush.xpose.msra.mxu0 0.0
      %734 = vmatpush.xpose.msra.mxu0 0.0
      %735 = vmatpush.xpose.msra.mxu0 0.0
      %736 = vmatpush.xpose.msra.mxu0 0.0
      %737 = vmatpush.xpose.msra.mxu0 0.0
      %738 = vmatpush.xpose.msra.mxu0 0.0
      %739 = vmatpush.xpose.msra.mxu0 0.0
      %740 = vmatpush.xpose.msra.mxu0 0.0
      %741 = vmatpush.xpose.msra.mxu0 %v724
      %742 = vmatmul.f32.gmra.mxu0 %v722
      %v743 = vpop.f32.mrf.mxu0
      %v744 = vadd.f32 %v512, %v743
      %745 = vdwg.mxu0
      %v746 = vsel %vm517, %v744, -inf
      %747 = vmax.xlane.f32.xlu0 %v746
      %v748 = vpop.xlane.xlu0 %747
      %v749 = vsub.f32 %v744, %v748
      %v750 = vmul.f32 %v749, 1.442695
      %v751 = vpow.pop %v750
      %v752 = vsel %vm517, %v751, 0.0
      %753 = vadd.xlane.f32.xlu0 %v752
      %v754 = vpop.xlane.xlu0 %753
      %v755 = vrcp.pop %v754
      %v756 = vmul.f32 %v754, %v755
      %v757 = vsub.f32 1.0, %v756
      %v758 = vmul.f32 %v755, %v757
      %v759 = vadd.f32 %v755, %v758
      %vm760 = vweird.f32 %v754
      %vm761 = vweird.f32 %v755
      %vm762 = vmor %vm760, %vm761
      %v763 = vsel %vm762, %v755, %v759
      %v764 = vand.u32 2147483647, %v754
      %vm765 = vcmp.eq.f32.partialorder %v764, 8.507059e+37
      %v766 = vand.u32 %v754, 2147483648
      %v767 = vor.u32 1.1754944e-38, %v766
      %v768 = vsel %vm765, %v767, %v763
      %v769 = vmul.f32 %v751, %v768
      %770 = vrot.lane.b32.xlu0 %v509, 48
      %v771 = vpop.permute.xlu0 %770
      %v774 = vsel %vm517, %v769, 0
      %776 = vmatpush.msra.mxu0 0.0
      %777 = vmatpush.msra.mxu0 0.0
      %778 = vmatpush.msra.mxu0 0.0
      %779 = vmatpush.msra.mxu0 0.0
      %780 = vmatpush.msra.mxu0 0.0
      %781 = vmatpush.msra.mxu0 0.0
      %782 = vmatpush.msra.mxu0 0.0
      %783 = vmatpush.msra.mxu0 0.0
      %784 = vmatpush.msra.mxu0 0.0
      %785 = vmatpush.msra.mxu0 0.0
      %786 = vmatpush.msra.mxu0 0.0
      %787 = vmatpush.msra.mxu0 0.0
      %788 = vmatpush.msra.mxu0 0.0
      %789 = vmatpush.msra.mxu0 0.0
      %790 = vmatpush.msra.mxu0 0.0
      %791 = vmatpush.msra.mxu0 %v771
      %792 = vmatmul.f32.gmra.mxu0 %v774
      %v793 = vpop.f32.mrf.mxu0
      %v794 = vadd.f32 0.0, %v793
      %795 = vdwg.mxu0
      %v796 = vld [vmem:[%s4 + $0x10] sm:$0xff]
      %v798 = vsel %vm517, %v794, 0
      %800 = vmatpush.msra.mxu0 0.0
      %801 = vmatpush.msra.mxu0 0.0
      %802 = vmatpush.msra.mxu0 0.0
      %803 = vmatpush.msra.mxu0 0.0
      %804 = vmatpush.msra.mxu0 0.0
      %805 = vmatpush.msra.mxu0 0.0
      %806 = vmatpush.msra.mxu0 0.0
      %807 = vmatpush.msra.mxu0 0.0
      %808 = vmatpush.msra.mxu0 0.0
      %809 = vmatpush.msra.mxu0 0.0
      %810 = vmatpush.msra.mxu0 0.0
      %811 = vmatpush.msra.mxu0 0.0
      %812 = vmatpush.msra.mxu0 0.0
      %813 = vmatpush.msra.mxu0 0.0
      %814 = vmatpush.msra.mxu0 0.0
      %815 = vmatpush.msra.mxu0 %v796
      %816 = vmatmul.f32.gmra.mxu0 %v798
      %v817 = vpop.f32.mrf.mxu0
      %v818 = vadd.f32 0.0, %v817
      %819 = vdwg.mxu0
      %v820 = vadd.f32 %v716, %v818
      %821 = vrot.lane.b32.xlu0 %v509, 104
      %v822 = vpop.permute.xlu0 %821
      %823 = vrot.lane.b32.xlu0 %v509, 72
      %v824 = vpop.permute.xlu0 %823
      %v825 = vsel %vm517, %v822, 0
      %v827 = vsel %vm517, %v824, 0
      %829 = vmatpush.xpose.msra.mxu0 0.0
      %830 = vmatpush.xpose.msra.mxu0 0.0
      %831 = vmatpush.xpose.msra.mxu0 0.0
      %832 = vmatpush.xpose.msra.mxu0 0.0
      %833 = vmatpush.xpose.msra.mxu0 0.0
      %834 = vmatpush.xpose.msra.mxu0 0.0
      %835 = vmatpush.xpose.msra.mxu0 0.0
      %836 = vmatpush.xpose.msra.mxu0 0.0
      %837 = vmatpush.xpose.msra.mxu0 0.0
      %838 = vmatpush.xpose.msra.mxu0 0.0
      %839 = vmatpush.xpose.msra.mxu0 0.0
      %840 = vmatpush.xpose.msra.mxu0 0.0
      %841 = vmatpush.xpose.msra.mxu0 0.0
      %842 = vmatpush.xpose.msra.mxu0 0.0
      %843 = vmatpush.xpose.msra.mxu0 0.0
      %844 = vmatpush.xpose.msra.mxu0 %v827
      %845 = vmatmul.f32.gmra.mxu0 %v825
      %v846 = vpop.f32.mrf.mxu0
      %v847 = vadd.f32 %v512, %v846
      %848 = vdwg.mxu0
      %v849 = vsel %vm517, %v847, -inf
      %850 = vmax.xlane.f32.xlu0 %v849
      %v851 = vpop.xlane.xlu0 %850
      %v852 = vsub.f32 %v847, %v851
      %v853 = vmul.f32 %v852, 1.442695
      %v854 = vpow.pop %v853
      %v855 = vsel %vm517, %v854, 0.0
      %856 = vadd.xlane.f32.xlu0 %v855
      %v857 = vpop.xlane.xlu0 %856
      %v858 = vrcp.pop %v857
      %v859 = vmul.f32 %v857, %v858
      %v860 = vsub.f32 1.0, %v859
      %v861 = vmul.f32 %v858, %v860
      %v862 = vadd.f32 %v858, %v861
      %vm863 = vweird.f32 %v857
      %vm864 = vweird.f32 %v858
      %vm865 = vmor %vm863, %vm864
      %v866 = vsel %vm865, %v858, %v862
      %v867 = vand.u32 2147483647, %v857
      %vm868 = vcmp.eq.f32.partialorder %v867, 8.507059e+37
      %v869 = vand.u32 %v857, 2147483648
      %v870 = vor.u32 1.1754944e-38, %v869
      %v871 = vsel %vm868, %v870, %v866
      %v872 = vmul.f32 %v854, %v871
      %873 = vrot.lane.b32.xlu0 %v509, 40
      %v874 = vpop.permute.xlu0 %873
      %v877 = vsel %vm517, %v872, 0
      %879 = vmatpush.msra.mxu0 0.0
      %880 = vmatpush.msra.mxu0 0.0
      %881 = vmatpush.msra.mxu0 0.0
      %882 = vmatpush.msra.mxu0 0.0
      %883 = vmatpush.msra.mxu0 0.0
      %884 = vmatpush.msra.mxu0 0.0
      %885 = vmatpush.msra.mxu0 0.0
      %886 = vmatpush.msra.mxu0 0.0
      %887 = vmatpush.msra.mxu0 0.0
      %888 = vmatpush.msra.mxu0 0.0
      %889 = vmatpush.msra.mxu0 0.0
      %890 = vmatpush.msra.mxu0 0.0
      %891 = vmatpush.msra.mxu0 0.0
      %892 = vmatpush.msra.mxu0 0.0
      %893 = vmatpush.msra.mxu0 0.0
      %894 = vmatpush.msra.mxu0 %v874
      %895 = vmatmul.f32.gmra.mxu0 %v877
      %v896 = vpop.f32.mrf.mxu0
      %v897 = vadd.f32 0.0, %v896
      %898 = vdwg.mxu0
      %v899 = vld [vmem:[%s4 + $0x18] sm:$0xff]
      %v901 = vsel %vm517, %v897, 0
      %903 = vmatpush.msra.mxu0 0.0
      %904 = vmatpush.msra.mxu0 0.0
      %905 = vmatpush.msra.mxu0 0.0
      %906 = vmatpush.msra.mxu0 0.0
      %907 = vmatpush.msra.mxu0 0.0
      %908 = vmatpush.msra.mxu0 0.0
      %909 = vmatpush.msra.mxu0 0.0
      %910 = vmatpush.msra.mxu0 0.0
      %911 = vmatpush.msra.mxu0 0.0
      %912 = vmatpush.msra.mxu0 0.0
      %913 = vmatpush.msra.mxu0 0.0
      %914 = vmatpush.msra.mxu0 0.0
      %915 = vmatpush.msra.mxu0 0.0
      %916 = vmatpush.msra.mxu0 0.0
      %917 = vmatpush.msra.mxu0 0.0
      %918 = vmatpush.msra.mxu0 %v899
      %919 = vmatmul.f32.gmra.mxu0 %v901
      %v920 = vpop.f32.mrf.mxu0
      %v921 = vadd.f32 0.0, %v920
      %922 = vdwg.mxu0
      %v923 = vadd.f32 %v820, %v921
      %v924 = vld [vmem:[%s5] sm:$0x1]
      %v926 = vperm.slane %v924, 0
      %v928 = vadd.f32 %v923, %v926
      %v929 = vadd.f32 %v928, %v477
      %v930 = vld [vmem:[%s6] sm:$0x1]
      %v931 = vld [vmem:[%s7] sm:$0x1]
      %v932 = vsel %vm487, %v929, 0.0
      %933 = vadd.xlane.f32.xlu0 %v932
      %v934 = vpop.xlane.xlu0 %933
      %v935 = vrcp.pop 32.0
      %v936 = vmul.f32 32.0, %v935
      %v937 = vsub.f32 1.0, %v936
      %v938 = vmul.f32 %v935, %v937
      %v939 = vadd.f32 %v935, %v938
      %vm940 = vweird.f32 %v935
      %v941 = vsel %vm940, %v935, %v939
      %v942 = vmul.f32 %v934, %v941
      %v943 = vsub.f32 %v929, %v942
      %v944 = vmul.f32 %v943, %v943
      %v945 = vsel %vm487, %v944, 0.0
      %946 = vadd.xlane.f32.xlu0 %v945
      %v947 = vpop.xlane.xlu0 %946
      %v948 = vmul.f32 %v947, %v941
      %v949 = vadd.f32 %v948, 1e-05
      %v950 = vrsqrt.pop %v949
      %v951 = vmul.f32 %v950, %v949
      %v952 = vmul.f32 %v951, %v950
      %v953 = vmul.f32 0.5, %v952
      %v954 = vsub.f32 1.5, %v953
      %v955 = vmul.f32 %v950, %v954
      %vm956 = vweird.f32 %v949
      %vm957 = vweird.f32 %v950
      %vm958 = vmor %vm956, %vm957
      %v959 = vsel %vm958, %v950, %v955
      %v960 = vmul.f32 %v943, %v959
      %v962 = vperm.slane %v930, 0
      %v964 = vmul.f32 %v960, %v962
      %v966 = vperm.slane %v931, 0
      %v968 = vadd.f32 %v964, %v966
      %v969 = vld [vmem:[%s8] sm:$0xff]
      %v970 = vld [vmem:[%s8 + $0x8] sm:$0xff]
      %v971 = vld [vmem:[%s8 + $0x10] sm:$0xff]
      %v972 = vld [vmem:[%s8 + $0x18] sm:$0xff]
      %v973 = vld [vmem:[%s9] sm:$0x1]
      %v975 = vperm.slane %v973, 0
      %v978 = vsel %vm487, %v968, 0
      %980 = vmatpush.msra.mxu0 0.0
      %981 = vmatpush.msra.mxu0 0.0
      %982 = vmatpush.msra.mxu0 0.0
      %983 = vmatpush.msra.mxu0 0.0
      %984 = vmatpush.msra.mxu0 0.0
      %985 = vmatpush.msra.mxu0 0.0
      %986 = vmatpush.msra.mxu0 0.0
      %987 = vmatpush.msra.mxu0 0.0
      %988 = vmatpush.msra.mxu0 0.0
      %989 = vmatpush.msra.mxu0 0.0
      %990 = vmatpush.msra.mxu0 0.0
      %991 = vmatpush.msra.mxu0 0.0
      %992 = vmatpush.msra.mxu0 %v972
      %993 = vmatpush.msra.mxu0 %v971
      %994 = vmatpush.msra.mxu0 %v970
      %995 = vmatpush.msra.mxu0 %v969
      %996 = vmatmul.f32.gmra.mxu0 %v978
      %v997 = vpop.f32.mrf.mxu0
      %v998 = vadd.f32 %v975, %v997
      %999 = vdwg.mxu0
      %v1000 = vmul.f32 %v998, %v998
      %v1001 = vmul.f32 %v998, %v1000
      %v1002 = vmul.f32 %v1001, 0.044715
      %v1003 = vadd.f32 %v998, %v1002
      %v1004 = vmul.f32 %v1003, 0.7978846
      %v1005 = vtanh.pop %v1004
      %v1006 = vadd.f32 %v1005, 1.0
      %v1007 = vmul.f32 %v1006, 0.5
      %v1008 = vmul.f32 %v998, %v1007
      %v1009 = vld [vmem:[%s10] sm:$0xff]
      %v1010 = vld [vmem:[%s10 + $0x8] sm:$0xff]
      %v1011 = vld [vmem:[%s10 + $0x10] sm:$0xff]
      %v1012 = vld [vmem:[%s10 + $0x18] sm:$0xff]
      %v1013 = vld [vmem:[%s10 + $0x20] sm:$0xff]
      %v1014 = vld [vmem:[%s10 + $0x28] sm:$0xff]
      %v1015 = vld [vmem:[%s10 + $0x30] sm:$0xff]
      %v1016 = vld [vmem:[%s10 + $0x38] sm:$0xff]
      %v1017 = vld [vmem:[%s11] sm:$0x1]
      %v1019 = vperm.slane %v1017, 0
      %vm1021 = vcmask 523264
      %v1023 = vsel %vm1021, %v1008, 0
      %1025 = vmatpush.msra.mxu0 0.0
      %1026 = vmatpush.msra.mxu0 0.0
      %1027 = vmatpush.msra.mxu0 0.0
      %1028 = vmatpush.msra.mxu0 0.0
      %1029 = vmatpush.msra.mxu0 0.0
      %1030 = vmatpush.msra.mxu0 0.0
      %1031 = vmatpush.msra.mxu0 0.0
      %1032 = vmatpush.msra.mxu0 0.0
      %1033 = vmatpush.msra.mxu0 %v1016
      %1034 = vmatpush.msra.mxu0 %v1015
      %1035 = vmatpush.msra.mxu0 %v1014
      %1036 = vmatpush.msra.mxu0 %v1013
      %1037 = vmatpush.msra.mxu0 %v1012
      %1038 = vmatpush.msra.mxu0 %v1011
      %1039 = vmatpush.msra.mxu0 %v1010
      %1040 = vmatpush.msra.mxu0 %v1009
      %1041 = vmatmul.f32.gmra.mxu0 %v1023
      %v1042 = vpop.f32.mrf.mxu0
      %v1043 = vadd.f32 %v1019, %v1042
      %1044 = vdwg.mxu0
      %v1045 = vadd.f32 %v1043, %v968
      %v1046 = vld [vmem:[%s12] sm:$0x1]
      %v1047 = vld [vmem:[%s13] sm:$0x1]
      %v1048 = vsel %vm487, %v1045, 0.0
      %1049 = vadd.xlane.f32.xlu0 %v1048
      %v1050 = vpop.xlane.xlu0 %1049
      %v1051 = vmul.f32 %v1050, %v941
      %v1052 = vsub.f32 %v1045, %v1051
      %v1053 = vmul.f32 %v1052, %v1052
      %v1054 = vsel %vm487, %v1053, 0.0
      %1055 = vadd.xlane.f32.xlu0 %v1054
      %v1056 = vpop.xlane.xlu0 %1055
      %v1057 = vmul.f32 %v1056, %v941
      %v1058 = vadd.f32 %v1057, 1e-05
      %v1059 = vrsqrt.pop %v1058
      %v1060 = vmul.f32 %v1059, %v1058
      %v1061 = vmul.f32 %v1060, %v1059
      %v1062 = vmul.f32 0.5, %v1061
      %v1063 = vsub.f32 1.5, %v1062
      %v1064 = vmul.f32 %v1059, %v1063
      %vm1065 = vweird.f32 %v1058
      %vm1066 = vweird.f32 %v1059
      %vm1067 = vmor %vm1065, %vm1066
      %v1068 = vsel %vm1067, %v1059, %v1064
      %v1069 = vmul.f32 %v1052, %v1068
      %v1071 = vperm.slane %v1046, 0
      %v1073 = vmul.f32 %v1069, %v1071
      %v1075 = vperm.slane %v1047, 0
      %v1077 = vadd.f32 %v1073, %v1075
      %1078 = vst.msk [vmem:[%s476] sm:$0xff] %vm487, %v1077
      %p1079 = scmp.lt.s32.totalorder %s25, 1
      %s1080 = scalar_select %p1079, %s25, 1
      %s1081 = smul.addr %s1080, 8
      %s1082 = scalar_lea.vmem %s14, %s1081
      // Predicated region
      $region77: #{roberta_forward.4} parent=75 // pred_check
        %p1083 = pneg %p347
      $region78: #{roberta_forward.4} parent=75 // pred_check_branch
        %1085 = sbr.rel (%p1083) target = $region80
      $region79: #{roberta_forward.4} parent=75 // pred_region
        _
      $region80: #{roberta_forward.4} parent=75 // pred_fallthru
        _
    $region76: #{roberta_forward.4} parent=5 // pred_fallthru
      _
    %p1086 = scmp.le.s32.totalorder 2, %s20
    // Predicated region
    $region81: #{roberta_forward.4} parent=5 // pred_check
      %p1087 = pneg %p1086
    $region82: #{roberta_forward.4} parent=5 // pred_check_branch
      %1089 = sbr.rel (%p1087) target = $region84
    $region83: #{roberta_forward.4} parent=5 // pred_region
      %s1090 = ssub.s32 %s20, 2
      // Predicated region
      $region85: #{roberta_forward.4} parent=83 // pred_check
        %p1091 = pneg %p353
      $region86: #{roberta_forward.4} parent=83 // pred_check_branch
        %1093 = sbr.rel (%p1091) target = $region88
      $region87: #{roberta_forward.4} parent=83 // pred_region
        %p1094 = scmp.lt.s32.totalorder %s26, 1
        %s1095 = scalar_select %p1094, %s26, 1
        %s1096 = smul.addr %s1095, 8
        %s1097 = scalar_lea.vmem %s14, %s1096
      $region88: #{roberta_forward.4} parent=83 // pred_fallthru
        _
    $region84: #{roberta_forward.4} parent=5 // pred_fallthru
      _
  $region6: #{roberta_forward.4} parent=0 // loop_footer
    %s24 = sadd.s32 1, %s20
  $region7: #{roberta_forward.4} parent=0 // loop_footer_branch
    %19 = sbr.rel target = $region3
  $region8: #{roberta_forward.4} parent=0 // loop_exit
    _

</llo_original>
